<compile_context>
chip_gen: v7x
topology: tpu7x:2x2x1
jax: 0.10.0
libtpu: 0.0.40
codegen_flags: <defaults>
</compile_context>

<pallas_src>
import jax
import jax.numpy as jnp
from jax.experimental import pallas as pl
from jax.experimental.pallas import tpu as pltpu

MARGIN = 0.7
EPS = 1e-09

_PER_STEP_INPUT_BYTES = 8 * 1024 * 1024   # streamed bytes (both operands) per grid step
_MAX_TN = 32768                           # row-tile cap (bounds unrolled IR / per-row tail)


def _round_up(x, m):
    return (x + m - 1) // m * m


def _default_num_splits():
    # v7x has 2 TensorCores per chip; v5e/v6e have 1 (a split there only adds
    # padding + an extra partial).
    try:
        kind = jax.devices()[0].device_kind.lower()
    except Exception:
        return 1
    return 2 if ("v7" in kind or "tpu7" in kind) else 1


def _choose_row_tile(n_rows, d, itemsize):
    # 2 operands * tn * d * itemsize streamed per step; ~8 MiB/step amortizes the
    # ~0.35 us per-step pipeline overhead on all generations. Double buffering
    # doubles the resident input footprint; lane-dense target/acc add only ~tn*4 B.
    tn = _PER_STEP_INPUT_BYTES // max(1, 2 * d * itemsize)
    tn = max(128, min(_MAX_TN, tn))
    tn = (tn // 128) * 128
    # Never tile beyond the (128-rounded) row count.
    return min(tn, _round_up(max(n_rows, 1), 128))


def balance_loss(predsA, predsB, target, *, row_tile=None, num_splits=None):
    N, D = predsA.shape
    itemsize = jnp.dtype(predsA.dtype).itemsize
    tn = row_tile if row_tile is not None else _choose_row_tile(N, D, itemsize)
    if tn % 128 != 0:
        raise ValueError("row_tile must be a multiple of 128")
    tg = tn // 128

    total_chunks = -(-N // tn)                        # real row chunks
    if num_splits is None:
        num_splits = _default_num_splits()
    num_splits = max(1, min(num_splits, total_chunks))
    chunks = -(-total_chunks // num_splits)           # chunks per split
    last_chunk = total_chunks - 1

    # Lane-dense per-row target: row r -> t3d[r // tn, (r % tn) // 128, r % 128].
    # Only O(N) scalars are padded/copied; predsA/predsB are untouched.
    t_pad = total_chunks * tn - N
    t3d = jnp.pad(target.astype(jnp.float32).reshape(N), (0, t_pad))
    t3d = t3d.reshape(total_chunks, tg, 128)

    def chunk_map(c, i):
        # Clamp so padding grid steps (when total_chunks % num_splits != 0) re-read
        # the last real chunk instead of issuing a fully-OOB block DMA; the in-kernel
        # row mask zeroes their contribution.
        return (jnp.minimum(c * chunks + i, last_chunk), 0)

    def chunk_map3(c, i):
        return (jnp.minimum(c * chunks + i, last_chunk), 0, 0)

    def kernel(a_ref, b_ref, t_ref, out_ref, acc_ref):
        i = pl.program_id(1)

        @pl.when(i == 0)
        def _():
            acc_ref[...] = jnp.zeros_like(acc_ref)

        # Native-dtype tiles, upcast on the VPU; view as (tg, 128, D) so the per-row
        # reduction result (and everything downstream) is lane-dense.
        a = a_ref[...].astype(jnp.float32).reshape(tg, 128, D)
        b = b_ref[...].astype(jnp.float32).reshape(tg, 128, D)
        diff = a - b
        dist = jnp.sum(diff * diff, axis=-1)                     # (tg, 128)

        t = t_ref[0]                                             # (tg, 128)
        relu_term = jnp.maximum(MARGIN - jnp.sqrt(dist + EPS), 0.0)
        losses = 0.5 * (t * dist + (1.0 - t) * relu_term * relu_term)

        # Mask rows past the true row count (tail of the last real chunk + any
        # clamped re-read padding steps). where() is NaN-safe against OOB garbage.
        base = (pl.program_id(0) * chunks + i) * tn
        row_ids = (base
                   + jax.lax.broadcasted_iota(jnp.int32, (tg, 128), 0) * 128
                   + jax.lax.broadcasted_iota(jnp.int32, (tg, 128), 1))
        acc_ref[...] += jnp.where(row_ids < N, losses, 0.0)

        @pl.when(i == chunks - 1)
        def _():
            # One lane-dense (8, 128) store per split; every element holds the
            # split's partial sum.
            out_ref[...] = jnp.full(out_ref.shape, jnp.sum(acc_ref[...]),
                                    out_ref.dtype)

    # TODO(synk): very wide rows (128 * D * itemsize >> a few MiB) would also need a
    # D (lane) grid axis; not needed for these shapes.
    # TODO(synk): on v7x, confirm in a trace that the leading "parallel" axis lands
    # one split per TensorCore (else switch to pltpu.CORE_PARALLEL / pl.core_map).
    out = pl.pallas_call(
        kernel,
        out_shape=jax.ShapeDtypeStruct((num_splits * 8, 128), jnp.float32),
        grid_spec=pltpu.PrefetchScalarGridSpec(
            num_scalar_prefetch=0,
            grid=(num_splits, chunks),
            in_specs=[
                pl.BlockSpec((tn, D), chunk_map),
                pl.BlockSpec((tn, D), chunk_map),
                pl.BlockSpec((1, tg, 128), chunk_map3),
            ],
            out_specs=pl.BlockSpec((8, 128), lambda c, i: (c, 0)),
            scratch_shapes=[pltpu.VMEM((tg, 128), jnp.float32)],
        ),
        compiler_params=pltpu.CompilerParams(
            dimension_semantics=("parallel", "arbitrary"),
            vmem_limit_bytes=48 * 1024 * 1024,
        ),
    )(predsA, predsB, t3d)
    # Rows 0, 8, 16, ... each hold one per-split partial.
    return jnp.sum(out[::8, 0])


def balance_loss_ref(predsA, predsB, target):
    a = predsA.astype(jnp.float32)
    b = predsB.astype(jnp.float32)
    distances = jnp.sum((a - b) ** 2, axis=1)
    relu_term = jnp.maximum(MARGIN - jnp.sqrt(distances + EPS), 0.0)
    t = target.astype(jnp.float32)
    losses = 0.5 * (t * distances + (1.0 - t) * relu_term ** 2)
    return jnp.sum(losses)


if __name__ == "__main__":
    key = jax.random.PRNGKey(0)
    cases = [
        dict(N=16, D=32, dtype=jnp.float32, kwargs={}),
        dict(N=13, D=32, dtype=jnp.float32, kwargs={}),                    # masked tail rows
        dict(N=24, D=32, dtype=jnp.bfloat16, kwargs={}),                   # bf16 inputs
        dict(N=300, D=32, dtype=jnp.float32, kwargs={}),                   # tg=3, partial block
        dict(N=300, D=32, dtype=jnp.float32,                               # multi-chunk + 2-way
             kwargs=dict(row_tile=128, num_splits=2)),                     # split + clamped step
    ]
    for case in cases:
        N, D = case["N"], case["D"]
        kA, kB, kT, key = jax.random.split(key, 4)
        predsA = jax.random.normal(kA, (N, D), dtype=jnp.float32).astype(case["dtype"])
        predsB = jax.random.normal(kB, (N, D), dtype=jnp.float32).astype(case["dtype"])
        target = jax.random.bernoulli(kT, 0.5, (N,)).astype(jnp.int32)

        out = jax.block_until_ready(
            balance_loss(predsA, predsB, target, **case["kwargs"]))
        ref = balance_loss_ref(predsA, predsB, target)
        assert jnp.allclose(out, ref, rtol=1e-4, atol=1e-4), (case, out, ref)
    print("KERNEL_OK")
</pallas_src>

<mosaic_0001>
module attributes {stable_mosaic.version = 11 : i64} {
  func.func @kernel(%arg0: i32, %arg1: i32, %arg2: memref<128x32xf32, #tpu.memory_space<vmem>>, %arg3: memref<128x32xf32, #tpu.memory_space<vmem>>, %arg4: memref<1x1x128xf32, #tpu.memory_space<vmem>>, %arg5: memref<8x128xf32, #tpu.memory_space<vmem>>, %arg6: memref<1x128xf32, #tpu.memory_space<vmem>>) attributes {dimension_semantics = [#tpu.dimension_semantics<parallel>, #tpu.dimension_semantics<arbitrary>], iteration_bounds = array<i64: 1, 1>, scalar_prefetch = 0 : i64, scratch_operands = 1 : i64, tpu.core_type = #tpu.core_type<tc>, window_params = [{transform_indices = @transform_0, window_bounds = array<i64: 128, 32>}, {transform_indices = @transform_1, window_bounds = array<i64: 128, 32>}, {transform_indices = @transform_2, window_bounds = array<i64: 1, 1, 128>}, {transform_indices = @transform_3, window_bounds = array<i64: 8, 128>}]} {
    %c0_i32 = arith.constant 0 : i32
    %0 = arith.cmpi eq, %arg1, %c0_i32 : i32
    %1 = arith.extui %0 : i1 to i32
    %c0_i32_0 = arith.constant 0 : i32
    %2 = arith.cmpi ne, %1, %c0_i32_0 : i32
    scf.if %2 {
      %cst_20 = arith.constant 0.000000e+00 : f32
      %47 = vector.broadcast %cst_20 : f32 to vector<1x128xf32>
      %c0_21 = arith.constant 0 : index
      %c0_22 = arith.constant 0 : index
      %48 = vector.load %arg6[%c0_21, %c0_22] : memref<1x128xf32, #tpu.memory_space<vmem>>, vector<1x128xf32>
      tpu.vector_store %arg6[%c0_21, %c0_22], %47 {strides = array<i32>} : memref<1x128xf32, #tpu.memory_space<vmem>>, vector<1x128xf32>,
    } else {
    }
    %c0 = arith.constant 0 : index
    %c0_1 = arith.constant 0 : index
    %3 = vector.load %arg2[%c0, %c0_1] : memref<128x32xf32, #tpu.memory_space<vmem>>, vector<128x32xf32>
    %4 = vector.shape_cast %3 : vector<128x32xf32> to vector<1x128x32xf32>
    %c0_2 = arith.constant 0 : index
    %c0_3 = arith.constant 0 : index
    %5 = vector.load %arg3[%c0_2, %c0_3] : memref<128x32xf32, #tpu.memory_space<vmem>>, vector<128x32xf32>
    %6 = vector.shape_cast %5 : vector<128x32xf32> to vector<1x128x32xf32>
    %7 = arith.subf %4, %6 : vector<1x128x32xf32>
    %8 = arith.mulf %7, %7 : vector<1x128x32xf32>
    %cst = arith.constant dense<0.000000e+00> : vector<1x128xf32>
    %9 = vector.multi_reduction <add>, %8, %cst [2] : vector<1x128x32xf32> to vector<1x128xf32>
    %c0_4 = arith.constant 0 : index
    %c0_5 = arith.constant 0 : index
    %c0_6 = arith.constant 0 : index
    %10 = vector.load %arg4[%c0_4, %c0_5, %c0_6] : memref<1x1x128xf32, #tpu.memory_space<vmem>>, vector<1x1x128xf32>
    %11 = vector.shape_cast %10 : vector<1x1x128xf32> to vector<1x128xf32>
    %cst_7 = arith.constant 9.99999971E-10 : f32
    %12 = vector.broadcast %cst_7 : f32 to vector<1x128xf32>
    %13 = arith.addf %9, %12 : vector<1x128xf32>
    %14 = math.sqrt %13 : vector<1x128xf32>
    %cst_8 = arith.constant 0.699999988 : f32
    %15 = vector.broadcast %cst_8 : f32 to vector<1x128xf32>
    %16 = arith.subf %15, %14 : vector<1x128xf32>
    %cst_9 = arith.constant 0.000000e+00 : f32
    %17 = vector.broadcast %cst_9 : f32 to vector<1x128xf32>
    %18 = arith.maximumf %16, %17 : vector<1x128xf32>
    %19 = arith.mulf %11, %9 : vector<1x128xf32>
    %cst_10 = arith.constant 1.000000e+00 : f32
    %20 = vector.broadcast %cst_10 : f32 to vector<1x128xf32>
    %21 = arith.subf %20, %11 : vector<1x128xf32>
    %22 = arith.mulf %21, %18 : vector<1x128xf32>
    %23 = arith.mulf %22, %18 : vector<1x128xf32>
    %24 = arith.addf %19, %23 : vector<1x128xf32>
    %cst_11 = arith.constant 5.000000e-01 : f32
    %25 = vector.broadcast %cst_11 : f32 to vector<1x128xf32>
    %26 = arith.mulf %25, %24 : vector<1x128xf32>
    %c1_i32 = arith.constant 1 : i32
    %27 = arith.muli %arg0, %c1_i32 : i32
    %28 = arith.addi %27, %arg1 : i32
    %c128_i32 = arith.constant 128 : i32
    %29 = arith.muli %28, %c128_i32 : i32
    %30 = tpu.iota {dimensions = array<i32: 0>} : vector<1x128xi32>
    %c128_i32_12 = arith.constant 128 : i32
    %31 = vector.broadcast %c128_i32_12 : i32 to vector<1x128xi32>
    %32 = arith.muli %30, %31 : vector<1x128xi32>
    %33 = vector.broadcast %29 : i32 to vector<1x128xi32>
    %34 = arith.addi %33, %32 : vector<1x128xi32>
    %35 = tpu.iota {dimensions = array<i32: 1>} : vector<1x128xi32>
    %36 = arith.addi %34, %35 : vector<1x128xi32>
    %c0_13 = arith.constant 0 : index
    %c0_14 = arith.constant 0 : index
    %37 = vector.load %arg6[%c0_13, %c0_14] : memref<1x128xf32, #tpu.memory_space<vmem>>, vector<1x128xf32>
    %c16_i32 = arith.constant 16 : i32
    %38 = vector.broadcast %c16_i32 : i32 to vector<1x128xi32>
    %39 = arith.cmpi slt, %36, %38 : vector<1x128xi32>
    %cst_15 = arith.constant 0.000000e+00 : f32
    %40 = vector.broadcast %cst_15 : f32 to vector<1x128xf32>
    %41 = arith.select %39, %26, %40 : vector<1x128xi1>, vector<1x128xf32>
    %42 = arith.addf %37, %41 : vector<1x128xf32>
    %c0_16 = arith.constant 0 : index
    %c0_17 = arith.constant 0 : index
    %43 = vector.load %arg6[%c0_16, %c0_17] : memref<1x128xf32, #tpu.memory_space<vmem>>, vector<1x128xf32>
    tpu.vector_store %arg6[%c0_16, %c0_17], %42 {strides = array<i32>} : memref<1x128xf32, #tpu.memory_space<vmem>>, vector<1x128xf32>,
    %c0_i32_18 = arith.constant 0 : i32
    %44 = arith.cmpi eq, %arg1, %c0_i32_18 : i32
    %45 = arith.extui %44 : i1 to i32
    %c0_i32_19 = arith.constant 0 : i32
    %46 = arith.cmpi ne, %45, %c0_i32_19 : i32
    scf.if %46 {
      %c0_20 = arith.constant 0 : index
      %c0_21 = arith.constant 0 : index
      %47 = vector.load %arg6[%c0_20, %c0_21] : memref<1x128xf32, #tpu.memory_space<vmem>>, vector<1x128xf32>
      %48 = vector.shape_cast %47 : vector<1x128xf32> to vector<1x1x128xf32>
      %cst_22 = arith.constant dense<0.000000e+00> : vector<1xf32>
      %49 = vector.multi_reduction <add>, %48, %cst_22 [1, 2] : vector<1x1x128xf32> to vector<1xf32>
      %50 = vector.shape_cast %49 : vector<1xf32> to vector<1x1x1xf32>
      %51 = vector.extract %50[0, 0, 0] : f32 from vector<1x1x1xf32>
      %52 = vector.broadcast %51 : f32 to vector<8x128xf32>
      %c0_23 = arith.constant 0 : index
      %c0_24 = arith.constant 0 : index
      %53 = vector.load %arg5[%c0_23, %c0_24] : memref<8x128xf32, #tpu.memory_space<vmem>>, vector<8x128xf32>
      tpu.vector_store %arg5[%c0_23, %c0_24], %52 {strides = array<i32>} : memref<8x128xf32, #tpu.memory_space<vmem>>, vector<8x128xf32>,
    } else {
    }
    return
  }
  func.func @transform_0(%arg0: i32, %arg1: i32) -> (i32, i32) {
    %c1_i32 = arith.constant 1 : i32
    %0 = arith.muli %arg0, %c1_i32 : i32
    %1 = arith.addi %0, %arg1 : i32
    %c0_i32 = arith.constant 0 : i32
    %2 = arith.minsi %1, %c0_i32 : i32
    %c0_i32_0 = arith.constant 0 : i32
    %c0_i32_1 = arith.constant 0 : i32
    return %2, %c0_i32_0 : i32, i32
  }
  func.func @transform_1(%arg0: i32, %arg1: i32) -> (i32, i32) {
    %c1_i32 = arith.constant 1 : i32
    %0 = arith.muli %arg0, %c1_i32 : i32
    %1 = arith.addi %0, %arg1 : i32
    %c0_i32 = arith.constant 0 : i32
    %2 = arith.minsi %1, %c0_i32 : i32
    %c0_i32_0 = arith.constant 0 : i32
    %c0_i32_1 = arith.constant 0 : i32
    return %2, %c0_i32_0 : i32, i32
  }
  func.func @transform_2(%arg0: i32, %arg1: i32) -> (i32, i32, i32) {
    %c1_i32 = arith.constant 1 : i32
    %0 = arith.muli %arg0, %c1_i32 : i32
    %1 = arith.addi %0, %arg1 : i32
    %c0_i32 = arith.constant 0 : i32
    %2 = arith.minsi %1, %c0_i32 : i32
    %c0_i32_0 = arith.constant 0 : i32
    %c0_i32_1 = arith.constant 0 : i32
    %c0_i32_2 = arith.constant 0 : i32
    return %2, %c0_i32_0, %c0_i32_1 : i32, i32, i32
  }
  func.func @transform_3(%arg0: i32, %arg1: i32) -> (i32, i32) {
    %c0_i32 = arith.constant 0 : i32
    %c0_i32_0 = arith.constant 0 : i32
    return %arg0, %c0_i32 : i32, i32
  }
}

</mosaic_0001>

<llo_original>
// kernel: tpu_custom_call.1
$region0: #{tpu_custom_call.1}
  #allocation0 [shape = 'u32[]', space=smem, size = 0x4, offset = 0x4, fixed_abs, tag = 'smem constant byte address 0x4 - core index']
  #allocation1 [shape = 'u32[144,128]{1,0:T(1,128)}', space=vmem, size = 0x12000, scoped, tag = 'internal scratch']
  #allocation2 [shape = 'f32[1,128]{1,0:T(1,128)}', space=vmem, size = 0x200, scoped, tag = 'scratch operand']
  %s0 = inlined_call_operand.hbm [shape: f32[16,32], index: 0, kind: input, shape index: {}]
  %s1 = inlined_call_operand.hbm [shape: f32[16,32], index: 1, kind: input, shape index: {}]
  %s2 = inlined_call_operand.vmem [shape: f32[1,1,128], index: 2, kind: input, shape index: {}]
  %s3 = inlined_call_operand.hbm [shape: f32[8,128], index: 3, kind: output, shape index: {}]
  %s4 = sld [smem:[#allocation0]]
  $region38: #{tpu_custom_call.1} parent=0
    _
  %s6 = ssub.s32 1, %s4
  %s7 = scalar_select 0, %s6, %s4
  $region1: #{tpu_custom_call.1} parent=0
    #allocation3 [shape = 'u8[65536]{0}', space=vmem, size = 0x10000, scoped, tag = 'input window, operand 0, single buffered']
    #allocation4 [shape = 's32[1]{0}', space=sflag, size = 0x4, scoped, tag = 'scoped memory for tpu_custom_call.1']
    #allocation5 [shape = 's32[1]{0}', space=sflag, size = 0x4, scoped, tag = 'scoped memory for tpu_custom_call.1']
    #allocation6 [shape = 'u8[65536]{0}', space=vmem, size = 0x10000, scoped, tag = 'input window, operand 1, single buffered']
    #allocation7 [shape = 's32[1]{0}', space=sflag, size = 0x4, scoped, tag = 'scoped memory for tpu_custom_call.1']
    #allocation8 [shape = 'u8[4096]{0}', space=vmem, size = 0x1000, scoped, tag = 'output window, operand 0, single buffered']
    %8 = vsyncpa [#allocation4], 0
    %9 = vsyncpa [#allocation7], 0
    %10 = vsyncpa [#allocation5], 0
    // Predicated region
    $region2: #{tpu_custom_call.1} parent=1 // pred_check
      _
    $region3: #{tpu_custom_call.1} parent=1 // pred_check_branch
      %12 = sbr.rel (0) target = $region5
    $region4: #{tpu_custom_call.1} parent=1 // pred_region
      %s13 = sadd.s32 0, 0
      %p14 = scmp.lt.s32.totalorder %s13, 0
      %s15 = scalar_select %p14, %s13, 0
      %s16 = smul.u32 16, %s15
      %s17 = ssub.s32 2, %s16
      %s18 = smul.u32 128, %s17
      %s20 = ssub.s32 2048, %s18
      %21 = vsyncadd [#allocation4], %s20
      %p22 = scmp.ne.s32.totalorder 0, %s18
      %s23 = smul.addr %s16, 128
      %s24 = scalar_lea.hbm %s0, %s23
      %s25 = smul.u32 8, %s17
      %s26 = sshll.u32 [#allocation3], 4
      %s27 = int_to_ptr.vmem [resolvable:$true] %s26
      %s28 = sshll.u32 %s25, 4
      %32 = dma.hbm_to_vmem [thread:$0]  (%p22), %s24, %s28, %s27, [#allocation4], 128, 128, 8
    $region5: #{tpu_custom_call.1} parent=1 // pred_fallthru
      _
    // Predicated region
    $region6: #{tpu_custom_call.1} parent=1 // pred_check
      _
    $region7: #{tpu_custom_call.1} parent=1 // pred_check_branch
      %34 = sbr.rel (0) target = $region9
    $region8: #{tpu_custom_call.1} parent=1 // pred_region
      %s35 = sadd.s32 0, 0
      %p36 = scmp.lt.s32.totalorder %s35, 0
      %s37 = scalar_select %p36, %s35, 0
      %s38 = smul.u32 16, %s37
      %s39 = ssub.s32 2, %s38
      %s40 = smul.u32 128, %s39
      %s42 = ssub.s32 2048, %s40
      %43 = vsyncadd [#allocation7], %s42
      %p44 = scmp.ne.s32.totalorder 0, %s40
      %s45 = smul.addr %s38, 128
      %s46 = scalar_lea.hbm %s1, %s45
      %s47 = smul.u32 8, %s39
      %s48 = sshll.u32 [#allocation6], 4
      %s49 = int_to_ptr.vmem [resolvable:$true] %s48
      %s50 = sshll.u32 %s47, 4
      %54 = dma.hbm_to_vmem [thread:$0]  (%p44), %s46, %s50, %s49, [#allocation7], 128, 128, 8
    $region9: #{tpu_custom_call.1} parent=1 // pred_fallthru
      _
    // Predicated region
    $region10: #{tpu_custom_call.1} parent=1 // pred_check
      _
    $region11: #{tpu_custom_call.1} parent=1 // pred_check_branch
      %56 = sbr.rel (0) target = $region13
    $region12: #{tpu_custom_call.1} parent=1 // pred_region
      %s57 = sadd.s32 0, 0
      %p58 = scmp.lt.s32.totalorder %s57, 0
      %s59 = scalar_select %p58, %s57, 0
      %p60 = scmp.lt.s32.totalorder %s59, 0
      %s61 = scalar_select %p60, %s59, 0
      %s62 = scalar_lea.vmem %s2, %s61
      %s63 = sadd.s32 0, 0
      %p64 = scmp.lt.s32.totalorder %s63, 0
      %s65 = scalar_select %p64, %s63, 0
    $region13: #{tpu_custom_call.1} parent=1 // pred_fallthru
      _
    // Predicated region
    $region14: #{tpu_custom_call.1} parent=1 // pred_check
      _
    $region15: #{tpu_custom_call.1} parent=1 // pred_check_branch
      %67 = sbr.rel (0) target = $region17
    $region16: #{tpu_custom_call.1} parent=1 // pred_region
      %68 = dma.done [#allocation4], 2048
    $region17: #{tpu_custom_call.1} parent=1 // pred_fallthru
      _
    // Predicated region
    $region18: #{tpu_custom_call.1} parent=1 // pred_check
      _
    $region19: #{tpu_custom_call.1} parent=1 // pred_check_branch
      %70 = sbr.rel (0) target = $region21
    $region20: #{tpu_custom_call.1} parent=1 // pred_region
      %71 = dma.done [#allocation7], 2048
    $region21: #{tpu_custom_call.1} parent=1 // pred_fallthru
      _
    %s72 = sadd.s32 0, 0
    %p73 = scmp.lt.s32.totalorder %s72, 0
    %s74 = scalar_select %p73, %s72, 0
    %p75 = scmp.lt.s32.totalorder %s74, 0
    %s76 = scalar_select %p75, %s74, 0
    %s77 = scalar_lea.vmem %s2, %s76
    %s78 = sadd.s32 0, 0
    %p79 = scmp.lt.s32.totalorder %s78, 0
    %s80 = scalar_select %p79, %s78, 0
    %s81 = smul.u32 16, %s80
    %s82 = ssub.s32 2, %s81
    %s83 = smul.u32 128, %s82
    %s84 = sadd.s32 0, 0
    %p85 = scmp.lt.s32.totalorder %s84, 0
    %s86 = scalar_select %p85, %s84, 0
    %s87 = smul.u32 16, %s86
    %s88 = ssub.s32 2, %s87
    %s89 = smul.u32 128, %s88
    %s90 = sadd.s32 0, 0
    %p91 = scmp.lt.s32.totalorder %s90, 0
    %s92 = scalar_select %p91, %s90, 0
    %p93 = scmp.lt.s32.totalorder %s92, 0
    %s94 = scalar_select %p93, %s92, 0
    %s95 = scalar_lea.vmem %s2, %s94
    %s96 = sadd.s32 0, 0
    %p97 = scmp.lt.s32.totalorder %s96, 0
    %s98 = scalar_select %p97, %s96, 0
    %p99 = scmp.eq.s32.totalorder 0, 0
    // Predicated region
    $region22: #{tpu_custom_call.1} parent=1 // pred_check
      %p100 = pneg %p99
    $region23: #{tpu_custom_call.1} parent=1 // pred_check_branch
      %102 = sbr.rel (%p100) target = $region25
    $region24: #{tpu_custom_call.1} parent=1 // pred_region
      %103 = vst [vmem:[#allocation2] sm:$0x1] 0.0
    $region25: #{tpu_custom_call.1} parent=1 // pred_fallthru
      _
    %v104 = vld [vmem:[#allocation3] sm:$0xff]
    %v105 = vld [vmem:[#allocation3 + $0x8] sm:$0xff]
    %v106 = vld [vmem:[#allocation3 + $0x10] sm:$0xff]
    %v107 = vld [vmem:[#allocation3 + $0x18] sm:$0xff]
    %v108 = vld [vmem:[#allocation3 + $0x20] sm:$0xff]
    %v109 = vld [vmem:[#allocation3 + $0x28] sm:$0xff]
    %v110 = vld [vmem:[#allocation3 + $0x30] sm:$0xff]
    %v111 = vld [vmem:[#allocation3 + $0x38] sm:$0xff]
    %v112 = vld [vmem:[#allocation3 + $0x40] sm:$0xff]
    %v113 = vld [vmem:[#allocation3 + $0x48] sm:$0xff]
    %v114 = vld [vmem:[#allocation3 + $0x50] sm:$0xff]
    %v115 = vld [vmem:[#allocation3 + $0x58] sm:$0xff]
    %v116 = vld [vmem:[#allocation3 + $0x60] sm:$0xff]
    %v117 = vld [vmem:[#allocation3 + $0x68] sm:$0xff]
    %v118 = vld [vmem:[#allocation3 + $0x70] sm:$0xff]
    %v119 = vld [vmem:[#allocation3 + $0x78] sm:$0xff]
    %v120 = vld [vmem:[#allocation6] sm:$0xff]
    %v121 = vld [vmem:[#allocation6 + $0x8] sm:$0xff]
    %v122 = vld [vmem:[#allocation6 + $0x10] sm:$0xff]
    %v123 = vld [vmem:[#allocation6 + $0x18] sm:$0xff]
    %v124 = vld [vmem:[#allocation6 + $0x20] sm:$0xff]
    %v125 = vld [vmem:[#allocation6 + $0x28] sm:$0xff]
    %v126 = vld [vmem:[#allocation6 + $0x30] sm:$0xff]
    %v127 = vld [vmem:[#allocation6 + $0x38] sm:$0xff]
    %v128 = vld [vmem:[#allocation6 + $0x40] sm:$0xff]
    %v129 = vld [vmem:[#allocation6 + $0x48] sm:$0xff]
    %v130 = vld [vmem:[#allocation6 + $0x50] sm:$0xff]
    %v131 = vld [vmem:[#allocation6 + $0x58] sm:$0xff]
    %v132 = vld [vmem:[#allocation6 + $0x60] sm:$0xff]
    %v133 = vld [vmem:[#allocation6 + $0x68] sm:$0xff]
    %v134 = vld [vmem:[#allocation6 + $0x70] sm:$0xff]
    %v135 = vld [vmem:[#allocation6 + $0x78] sm:$0xff]
    %v136 = vsub.f32 %v104, %v120
    %v137 = vsub.f32 %v105, %v121
    %v138 = vsub.f32 %v106, %v122
    %v139 = vsub.f32 %v107, %v123
    %v140 = vsub.f32 %v108, %v124
    %v141 = vsub.f32 %v109, %v125
    %v142 = vsub.f32 %v110, %v126
    %v143 = vsub.f32 %v111, %v127
    %v144 = vsub.f32 %v112, %v128
    %v145 = vsub.f32 %v113, %v129
    %v146 = vsub.f32 %v114, %v130
    %v147 = vsub.f32 %v115, %v131
    %v148 = vsub.f32 %v116, %v132
    %v149 = vsub.f32 %v117, %v133
    %v150 = vsub.f32 %v118, %v134
    %v151 = vsub.f32 %v119, %v135
    %v152 = vmul.f32 %v136, %v136
    %v153 = vmul.f32 %v137, %v137
    %v154 = vmul.f32 %v138, %v138
    %v155 = vmul.f32 %v139, %v139
    %v156 = vmul.f32 %v140, %v140
    %v157 = vmul.f32 %v141, %v141
    %v158 = vmul.f32 %v142, %v142
    %v159 = vmul.f32 %v143, %v143
    %v160 = vmul.f32 %v144, %v144
    %v161 = vmul.f32 %v145, %v145
    %v162 = vmul.f32 %v146, %v146
    %v163 = vmul.f32 %v147, %v147
    %v164 = vmul.f32 %v148, %v148
    %v165 = vmul.f32 %v149, %v149
    %v166 = vmul.f32 %v150, %v150
    %v167 = vmul.f32 %v151, %v151
    %vm168 = vcmask 261120
    %v169 = vsel %vm168, %v152, 0.0
    %170 = vadd.xlane.f32.xlu0 %v169
    %v171 = vpop.xlane.xlu0 %170
    %v172 = vsel %vm168, %v153, 0.0
    %173 = vadd.xlane.f32.xlu0 %v172
    %v174 = vpop.xlane.xlu0 %173
    %v175 = vsel %vm168, %v154, 0.0
    %176 = vadd.xlane.f32.xlu0 %v175
    %v177 = vpop.xlane.xlu0 %176
    %v178 = vsel %vm168, %v155, 0.0
    %179 = vadd.xlane.f32.xlu0 %v178
    %v180 = vpop.xlane.xlu0 %179
    %v181 = vsel %vm168, %v156, 0.0
    %182 = vadd.xlane.f32.xlu0 %v181
    %v183 = vpop.xlane.xlu0 %182
    %v184 = vsel %vm168, %v157, 0.0
    %185 = vadd.xlane.f32.xlu0 %v184
    %v186 = vpop.xlane.xlu0 %185
    %v187 = vsel %vm168, %v158, 0.0
    %188 = vadd.xlane.f32.xlu0 %v187
    %v189 = vpop.xlane.xlu0 %188
    %v190 = vsel %vm168, %v159, 0.0
    %191 = vadd.xlane.f32.xlu0 %v190
    %v192 = vpop.xlane.xlu0 %191
    %v193 = vsel %vm168, %v160, 0.0
    %194 = vadd.xlane.f32.xlu0 %v193
    %v195 = vpop.xlane.xlu0 %194
    %v196 = vsel %vm168, %v161, 0.0
    %197 = vadd.xlane.f32.xlu0 %v196
    %v198 = vpop.xlane.xlu0 %197
    %v199 = vsel %vm168, %v162, 0.0
    %200 = vadd.xlane.f32.xlu0 %v199
    %v201 = vpop.xlane.xlu0 %200
    %v202 = vsel %vm168, %v163, 0.0
    %203 = vadd.xlane.f32.xlu0 %v202
    %v204 = vpop.xlane.xlu0 %203
    %v205 = vsel %vm168, %v164, 0.0
    %206 = vadd.xlane.f32.xlu0 %v205
    %v207 = vpop.xlane.xlu0 %206
    %v208 = vsel %vm168, %v165, 0.0
    %209 = vadd.xlane.f32.xlu0 %v208
    %v210 = vpop.xlane.xlu0 %209
    %v211 = vsel %vm168, %v166, 0.0
    %212 = vadd.xlane.f32.xlu0 %v211
    %v213 = vpop.xlane.xlu0 %212
    %v214 = vsel %vm168, %v167, 0.0
    %215 = vadd.xlane.f32.xlu0 %v214
    %v216 = vpop.xlane.xlu0 %215
    %v217 = vld [vmem:[%s95] sm:$0x1]
    %v218 = vadd.f32 %v171, 1e-09
    %v219 = vadd.f32 %v174, 1e-09
    %v220 = vadd.f32 %v177, 1e-09
    %v221 = vadd.f32 %v180, 1e-09
    %v222 = vadd.f32 %v183, 1e-09
    %v223 = vadd.f32 %v186, 1e-09
    %v224 = vadd.f32 %v189, 1e-09
    %v225 = vadd.f32 %v192, 1e-09
    %v226 = vadd.f32 %v195, 1e-09
    %v227 = vadd.f32 %v198, 1e-09
    %v228 = vadd.f32 %v201, 1e-09
    %v229 = vadd.f32 %v204, 1e-09
    %v230 = vadd.f32 %v207, 1e-09
    %v231 = vadd.f32 %v210, 1e-09
    %v232 = vadd.f32 %v213, 1e-09
    %v233 = vadd.f32 %v216, 1e-09
    %v234 = vrsqrt.pop %v218
    %v235 = vmul.f32 %v218, %v234
    %vm236 = vcmp.eq.f32.partialorder %v218, inf
    %v237 = vsel %vm236, %v218, %v235
    %vm238 = vcmp.eq.f32.partialorder %v218, 0.0
    %v239 = vand.u32 %v218, 2147483648
    %v240 = vsel %vm238, %v239, %v237
    %v241 = vrsqrt.pop %v219
    %v242 = vmul.f32 %v219, %v241
    %vm243 = vcmp.eq.f32.partialorder %v219, inf
    %v244 = vsel %vm243, %v219, %v242
    %vm245 = vcmp.eq.f32.partialorder %v219, 0.0
    %v246 = vand.u32 %v219, 2147483648
    %v247 = vsel %vm245, %v246, %v244
    %v248 = vrsqrt.pop %v220
    %v249 = vmul.f32 %v220, %v248
    %vm250 = vcmp.eq.f32.partialorder %v220, inf
    %v251 = vsel %vm250, %v220, %v249
    %vm252 = vcmp.eq.f32.partialorder %v220, 0.0
    %v253 = vand.u32 %v220, 2147483648
    %v254 = vsel %vm252, %v253, %v251
    %v255 = vrsqrt.pop %v221
    %v256 = vmul.f32 %v221, %v255
    %vm257 = vcmp.eq.f32.partialorder %v221, inf
    %v258 = vsel %vm257, %v221, %v256
    %vm259 = vcmp.eq.f32.partialorder %v221, 0.0
    %v260 = vand.u32 %v221, 2147483648
    %v261 = vsel %vm259, %v260, %v258
    %v262 = vrsqrt.pop %v222
    %v263 = vmul.f32 %v222, %v262
    %vm264 = vcmp.eq.f32.partialorder %v222, inf
    %v265 = vsel %vm264, %v222, %v263
    %vm266 = vcmp.eq.f32.partialorder %v222, 0.0
    %v267 = vand.u32 %v222, 2147483648
    %v268 = vsel %vm266, %v267, %v265
    %v269 = vrsqrt.pop %v223
    %v270 = vmul.f32 %v223, %v269
    %vm271 = vcmp.eq.f32.partialorder %v223, inf
    %v272 = vsel %vm271, %v223, %v270
    %vm273 = vcmp.eq.f32.partialorder %v223, 0.0
    %v274 = vand.u32 %v223, 2147483648
    %v275 = vsel %vm273, %v274, %v272
    %v276 = vrsqrt.pop %v224
    %v277 = vmul.f32 %v224, %v276
    %vm278 = vcmp.eq.f32.partialorder %v224, inf
    %v279 = vsel %vm278, %v224, %v277
    %vm280 = vcmp.eq.f32.partialorder %v224, 0.0
    %v281 = vand.u32 %v224, 2147483648
    %v282 = vsel %vm280, %v281, %v279
    %v283 = vrsqrt.pop %v225
    %v284 = vmul.f32 %v225, %v283
    %vm285 = vcmp.eq.f32.partialorder %v225, inf
    %v286 = vsel %vm285, %v225, %v284
    %vm287 = vcmp.eq.f32.partialorder %v225, 0.0
    %v288 = vand.u32 %v225, 2147483648
    %v289 = vsel %vm287, %v288, %v286
    %v290 = vrsqrt.pop %v226
    %v291 = vmul.f32 %v226, %v290
    %vm292 = vcmp.eq.f32.partialorder %v226, inf
    %v293 = vsel %vm292, %v226, %v291
    %vm294 = vcmp.eq.f32.partialorder %v226, 0.0
    %v295 = vand.u32 %v226, 2147483648
    %v296 = vsel %vm294, %v295, %v293
    %v297 = vrsqrt.pop %v227
    %v298 = vmul.f32 %v227, %v297
    %vm299 = vcmp.eq.f32.partialorder %v227, inf
    %v300 = vsel %vm299, %v227, %v298
    %vm301 = vcmp.eq.f32.partialorder %v227, 0.0
    %v302 = vand.u32 %v227, 2147483648
    %v303 = vsel %vm301, %v302, %v300
    %v304 = vrsqrt.pop %v228
    %v305 = vmul.f32 %v228, %v304
    %vm306 = vcmp.eq.f32.partialorder %v228, inf
    %v307 = vsel %vm306, %v228, %v305
    %vm308 = vcmp.eq.f32.partialorder %v228, 0.0
    %v309 = vand.u32 %v228, 2147483648
    %v310 = vsel %vm308, %v309, %v307
    %v311 = vrsqrt.pop %v229
    %v312 = vmul.f32 %v229, %v311
    %vm313 = vcmp.eq.f32.partialorder %v229, inf
    %v314 = vsel %vm313, %v229, %v312
    %vm315 = vcmp.eq.f32.partialorder %v229, 0.0
    %v316 = vand.u32 %v229, 2147483648
    %v317 = vsel %vm315, %v316, %v314
    %v318 = vrsqrt.pop %v230
    %v319 = vmul.f32 %v230, %v318
    %vm320 = vcmp.eq.f32.partialorder %v230, inf
    %v321 = vsel %vm320, %v230, %v319
    %vm322 = vcmp.eq.f32.partialorder %v230, 0.0
    %v323 = vand.u32 %v230, 2147483648
    %v324 = vsel %vm322, %v323, %v321
    %v325 = vrsqrt.pop %v231
    %v326 = vmul.f32 %v231, %v325
    %vm327 = vcmp.eq.f32.partialorder %v231, inf
    %v328 = vsel %vm327, %v231, %v326
    %vm329 = vcmp.eq.f32.partialorder %v231, 0.0
    %v330 = vand.u32 %v231, 2147483648
    %v331 = vsel %vm329, %v330, %v328
    %v332 = vrsqrt.pop %v232
    %v333 = vmul.f32 %v232, %v332
    %vm334 = vcmp.eq.f32.partialorder %v232, inf
    %v335 = vsel %vm334, %v232, %v333
    %vm336 = vcmp.eq.f32.partialorder %v232, 0.0
    %v337 = vand.u32 %v232, 2147483648
    %v338 = vsel %vm336, %v337, %v335
    %v339 = vrsqrt.pop %v233
    %v340 = vmul.f32 %v233, %v339
    %vm341 = vcmp.eq.f32.partialorder %v233, inf
    %v342 = vsel %vm341, %v233, %v340
    %vm343 = vcmp.eq.f32.partialorder %v233, 0.0
    %v344 = vand.u32 %v233, 2147483648
    %v345 = vsel %vm343, %v344, %v342
    %v346 = vsub.f32 0.7, %v240
    %v347 = vsub.f32 0.7, %v247
    %v348 = vsub.f32 0.7, %v254
    %v349 = vsub.f32 0.7, %v261
    %v350 = vsub.f32 0.7, %v268
    %v351 = vsub.f32 0.7, %v275
    %v352 = vsub.f32 0.7, %v282
    %v353 = vsub.f32 0.7, %v289
    %v354 = vsub.f32 0.7, %v296
    %v355 = vsub.f32 0.7, %v303
    %v356 = vsub.f32 0.7, %v310
    %v357 = vsub.f32 0.7, %v317
    %v358 = vsub.f32 0.7, %v324
    %v359 = vsub.f32 0.7, %v331
    %v360 = vsub.f32 0.7, %v338
    %v361 = vsub.f32 0.7, %v345
    %v362 = vmax.f32 %v346, 0.0
    %v363 = vmax.f32 %v347, 0.0
    %v364 = vmax.f32 %v348, 0.0
    %v365 = vmax.f32 %v349, 0.0
    %v366 = vmax.f32 %v350, 0.0
    %v367 = vmax.f32 %v351, 0.0
    %v368 = vmax.f32 %v352, 0.0
    %v369 = vmax.f32 %v353, 0.0
    %v370 = vmax.f32 %v354, 0.0
    %v371 = vmax.f32 %v355, 0.0
    %v372 = vmax.f32 %v356, 0.0
    %v373 = vmax.f32 %v357, 0.0
    %v374 = vmax.f32 %v358, 0.0
    %v375 = vmax.f32 %v359, 0.0
    %v376 = vmax.f32 %v360, 0.0
    %v377 = vmax.f32 %v361, 0.0
    %v394 = vlaneseq
    %v395 = vshrl.u32 %v394, 7
    %v396 = vsub.s32 0, %v395
    %v397 = vrot.slane %v171, %v396
    %v398 = vlaneseq
    %v399 = vshrl.u32 %v398, 7
    %v400 = vsub.s32 1, %v399
    %v401 = vrot.slane %v171, %v400
    %v402 = vlaneseq
    %v403 = vshrl.u32 %v402, 7
    %v404 = vsub.s32 2, %v403
    %v405 = vrot.slane %v171, %v404
    %v406 = vlaneseq
    %v407 = vshrl.u32 %v406, 7
    %v408 = vsub.s32 3, %v407
    %v409 = vrot.slane %v171, %v408
    %v410 = vlaneseq
    %v411 = vshrl.u32 %v410, 7
    %v412 = vsub.s32 4, %v411
    %v413 = vrot.slane %v171, %v412
    %v414 = vlaneseq
    %v415 = vshrl.u32 %v414, 7
    %v416 = vsub.s32 5, %v415
    %v417 = vrot.slane %v171, %v416
    %v418 = vlaneseq
    %v419 = vshrl.u32 %v418, 7
    %v420 = vsub.s32 6, %v419
    %v421 = vrot.slane %v171, %v420
    %v422 = vlaneseq
    %v423 = vshrl.u32 %v422, 7
    %v424 = vsub.s32 7, %v423
    %v425 = vrot.slane %v171, %v424
    %v426 = vlaneseq
    %v427 = vshrl.u32 %v426, 7
    %v428 = vsub.s32 0, %v427
    %v429 = vrot.slane %v174, %v428
    %v430 = vlaneseq
    %v431 = vshrl.u32 %v430, 7
    %v432 = vsub.s32 1, %v431
    %v433 = vrot.slane %v174, %v432
    %v434 = vlaneseq
    %v435 = vshrl.u32 %v434, 7
    %v436 = vsub.s32 2, %v435
    %v437 = vrot.slane %v174, %v436
    %v438 = vlaneseq
    %v439 = vshrl.u32 %v438, 7
    %v440 = vsub.s32 3, %v439
    %v441 = vrot.slane %v174, %v440
    %v442 = vlaneseq
    %v443 = vshrl.u32 %v442, 7
    %v444 = vsub.s32 4, %v443
    %v445 = vrot.slane %v174, %v444
    %v446 = vlaneseq
    %v447 = vshrl.u32 %v446, 7
    %v448 = vsub.s32 5, %v447
    %v449 = vrot.slane %v174, %v448
    %v450 = vlaneseq
    %v451 = vshrl.u32 %v450, 7
    %v452 = vsub.s32 6, %v451
    %v453 = vrot.slane %v174, %v452
    %v454 = vlaneseq
    %v455 = vshrl.u32 %v454, 7
    %v456 = vsub.s32 7, %v455
    %v457 = vrot.slane %v174, %v456
    %v458 = vlaneseq
    %v459 = vshrl.u32 %v458, 7
    %v460 = vsub.s32 0, %v459
    %v461 = vrot.slane %v177, %v460
    %v462 = vlaneseq
    %v463 = vshrl.u32 %v462, 7
    %v464 = vsub.s32 1, %v463
    %v465 = vrot.slane %v177, %v464
    %v466 = vlaneseq
    %v467 = vshrl.u32 %v466, 7
    %v468 = vsub.s32 2, %v467
    %v469 = vrot.slane %v177, %v468
    %v470 = vlaneseq
    %v471 = vshrl.u32 %v470, 7
    %v472 = vsub.s32 3, %v471
    %v473 = vrot.slane %v177, %v472
    %v474 = vlaneseq
    %v475 = vshrl.u32 %v474, 7
    %v476 = vsub.s32 4, %v475
    %v477 = vrot.slane %v177, %v476
    %v478 = vlaneseq
    %v479 = vshrl.u32 %v478, 7
    %v480 = vsub.s32 5, %v479
    %v481 = vrot.slane %v177, %v480
    %v482 = vlaneseq
    %v483 = vshrl.u32 %v482, 7
    %v484 = vsub.s32 6, %v483
    %v485 = vrot.slane %v177, %v484
    %v486 = vlaneseq
    %v487 = vshrl.u32 %v486, 7
    %v488 = vsub.s32 7, %v487
    %v489 = vrot.slane %v177, %v488
    %v490 = vlaneseq
    %v491 = vshrl.u32 %v490, 7
    %v492 = vsub.s32 0, %v491
    %v493 = vrot.slane %v180, %v492
    %v494 = vlaneseq
    %v495 = vshrl.u32 %v494, 7
    %v496 = vsub.s32 1, %v495
    %v497 = vrot.slane %v180, %v496
    %v498 = vlaneseq
    %v499 = vshrl.u32 %v498, 7
    %v500 = vsub.s32 2, %v499
    %v501 = vrot.slane %v180, %v500
    %v502 = vlaneseq
    %v503 = vshrl.u32 %v502, 7
    %v504 = vsub.s32 3, %v503
    %v505 = vrot.slane %v180, %v504
    %v506 = vlaneseq
    %v507 = vshrl.u32 %v506, 7
    %v508 = vsub.s32 4, %v507
    %v509 = vrot.slane %v180, %v508
    %v510 = vlaneseq
    %v511 = vshrl.u32 %v510, 7
    %v512 = vsub.s32 5, %v511
    %v513 = vrot.slane %v180, %v512
    %v514 = vlaneseq
    %v515 = vshrl.u32 %v514, 7
    %v516 = vsub.s32 6, %v515
    %v517 = vrot.slane %v180, %v516
    %v518 = vlaneseq
    %v519 = vshrl.u32 %v518, 7
    %v520 = vsub.s32 7, %v519
    %v521 = vrot.slane %v180, %v520
    %v522 = vlaneseq
    %v523 = vshrl.u32 %v522, 7
    %v524 = vsub.s32 0, %v523
    %v525 = vrot.slane %v183, %v524
    %v526 = vlaneseq
    %v527 = vshrl.u32 %v526, 7
    %v528 = vsub.s32 1, %v527
    %v529 = vrot.slane %v183, %v528
    %v530 = vlaneseq
    %v531 = vshrl.u32 %v530, 7
    %v532 = vsub.s32 2, %v531
    %v533 = vrot.slane %v183, %v532
    %v534 = vlaneseq
    %v535 = vshrl.u32 %v534, 7
    %v536 = vsub.s32 3, %v535
    %v537 = vrot.slane %v183, %v536
    %v538 = vlaneseq
    %v539 = vshrl.u32 %v538, 7
    %v540 = vsub.s32 4, %v539
    %v541 = vrot.slane %v183, %v540
    %v542 = vlaneseq
    %v543 = vshrl.u32 %v542, 7
    %v544 = vsub.s32 5, %v543
    %v545 = vrot.slane %v183, %v544
    %v546 = vlaneseq
    %v547 = vshrl.u32 %v546, 7
    %v548 = vsub.s32 6, %v547
    %v549 = vrot.slane %v183, %v548
    %v550 = vlaneseq
    %v551 = vshrl.u32 %v550, 7
    %v552 = vsub.s32 7, %v551
    %v553 = vrot.slane %v183, %v552
    %v554 = vlaneseq
    %v555 = vshrl.u32 %v554, 7
    %v556 = vsub.s32 0, %v555
    %v557 = vrot.slane %v186, %v556
    %v558 = vlaneseq
    %v559 = vshrl.u32 %v558, 7
    %v560 = vsub.s32 1, %v559
    %v561 = vrot.slane %v186, %v560
    %v562 = vlaneseq
    %v563 = vshrl.u32 %v562, 7
    %v564 = vsub.s32 2, %v563
    %v565 = vrot.slane %v186, %v564
    %v566 = vlaneseq
    %v567 = vshrl.u32 %v566, 7
    %v568 = vsub.s32 3, %v567
    %v569 = vrot.slane %v186, %v568
    %v570 = vlaneseq
    %v571 = vshrl.u32 %v570, 7
    %v572 = vsub.s32 4, %v571
    %v573 = vrot.slane %v186, %v572
    %v574 = vlaneseq
    %v575 = vshrl.u32 %v574, 7
    %v576 = vsub.s32 5, %v575
    %v577 = vrot.slane %v186, %v576
    %v578 = vlaneseq
    %v579 = vshrl.u32 %v578, 7
    %v580 = vsub.s32 6, %v579
    %v581 = vrot.slane %v186, %v580
    %v582 = vlaneseq
    %v583 = vshrl.u32 %v582, 7
    %v584 = vsub.s32 7, %v583
    %v585 = vrot.slane %v186, %v584
    %v586 = vlaneseq
    %v587 = vshrl.u32 %v586, 7
    %v588 = vsub.s32 0, %v587
    %v589 = vrot.slane %v189, %v588
    %v590 = vlaneseq
    %v591 = vshrl.u32 %v590, 7
    %v592 = vsub.s32 1, %v591
    %v593 = vrot.slane %v189, %v592
    %v594 = vlaneseq
    %v595 = vshrl.u32 %v594, 7
    %v596 = vsub.s32 2, %v595
    %v597 = vrot.slane %v189, %v596
    %v598 = vlaneseq
    %v599 = vshrl.u32 %v598, 7
    %v600 = vsub.s32 3, %v599
    %v601 = vrot.slane %v189, %v600
    %v602 = vlaneseq
    %v603 = vshrl.u32 %v602, 7
    %v604 = vsub.s32 4, %v603
    %v605 = vrot.slane %v189, %v604
    %v606 = vlaneseq
    %v607 = vshrl.u32 %v606, 7
    %v608 = vsub.s32 5, %v607
    %v609 = vrot.slane %v189, %v608
    %v610 = vlaneseq
    %v611 = vshrl.u32 %v610, 7
    %v612 = vsub.s32 6, %v611
    %v613 = vrot.slane %v189, %v612
    %v614 = vlaneseq
    %v615 = vshrl.u32 %v614, 7
    %v616 = vsub.s32 7, %v615
    %v617 = vrot.slane %v189, %v616
    %v618 = vlaneseq
    %v619 = vshrl.u32 %v618, 7
    %v620 = vsub.s32 0, %v619
    %v621 = vrot.slane %v192, %v620
    %v622 = vlaneseq
    %v623 = vshrl.u32 %v622, 7
    %v624 = vsub.s32 1, %v623
    %v625 = vrot.slane %v192, %v624
    %v626 = vlaneseq
    %v627 = vshrl.u32 %v626, 7
    %v628 = vsub.s32 2, %v627
    %v629 = vrot.slane %v192, %v628
    %v630 = vlaneseq
    %v631 = vshrl.u32 %v630, 7
    %v632 = vsub.s32 3, %v631
    %v633 = vrot.slane %v192, %v632
    %v634 = vlaneseq
    %v635 = vshrl.u32 %v634, 7
    %v636 = vsub.s32 4, %v635
    %v637 = vrot.slane %v192, %v636
    %v638 = vlaneseq
    %v639 = vshrl.u32 %v638, 7
    %v640 = vsub.s32 5, %v639
    %v641 = vrot.slane %v192, %v640
    %v642 = vlaneseq
    %v643 = vshrl.u32 %v642, 7
    %v644 = vsub.s32 6, %v643
    %v645 = vrot.slane %v192, %v644
    %v646 = vlaneseq
    %v647 = vshrl.u32 %v646, 7
    %v648 = vsub.s32 7, %v647
    %v649 = vrot.slane %v192, %v648
    %v650 = vlaneseq
    %v651 = vshrl.u32 %v650, 7
    %v652 = vsub.s32 0, %v651
    %v653 = vrot.slane %v195, %v652
    %v654 = vlaneseq
    %v655 = vshrl.u32 %v654, 7
    %v656 = vsub.s32 1, %v655
    %v657 = vrot.slane %v195, %v656
    %v658 = vlaneseq
    %v659 = vshrl.u32 %v658, 7
    %v660 = vsub.s32 2, %v659
    %v661 = vrot.slane %v195, %v660
    %v662 = vlaneseq
    %v663 = vshrl.u32 %v662, 7
    %v664 = vsub.s32 3, %v663
    %v665 = vrot.slane %v195, %v664
    %v666 = vlaneseq
    %v667 = vshrl.u32 %v666, 7
    %v668 = vsub.s32 4, %v667
    %v669 = vrot.slane %v195, %v668
    %v670 = vlaneseq
    %v671 = vshrl.u32 %v670, 7
    %v672 = vsub.s32 5, %v671
    %v673 = vrot.slane %v195, %v672
    %v674 = vlaneseq
    %v675 = vshrl.u32 %v674, 7
    %v676 = vsub.s32 6, %v675
    %v677 = vrot.slane %v195, %v676
    %v678 = vlaneseq
    %v679 = vshrl.u32 %v678, 7
    %v680 = vsub.s32 7, %v679
    %v681 = vrot.slane %v195, %v680
    %v682 = vlaneseq
    %v683 = vshrl.u32 %v682, 7
    %v684 = vsub.s32 0, %v683
    %v685 = vrot.slane %v198, %v684
    %v686 = vlaneseq
    %v687 = vshrl.u32 %v686, 7
    %v688 = vsub.s32 1, %v687
    %v689 = vrot.slane %v198, %v688
    %v690 = vlaneseq
    %v691 = vshrl.u32 %v690, 7
    %v692 = vsub.s32 2, %v691
    %v693 = vrot.slane %v198, %v692
    %v694 = vlaneseq
    %v695 = vshrl.u32 %v694, 7
    %v696 = vsub.s32 3, %v695
    %v697 = vrot.slane %v198, %v696
    %v698 = vlaneseq
    %v699 = vshrl.u32 %v698, 7
    %v700 = vsub.s32 4, %v699
    %v701 = vrot.slane %v198, %v700
    %v702 = vlaneseq
    %v703 = vshrl.u32 %v702, 7
    %v704 = vsub.s32 5, %v703
    %v705 = vrot.slane %v198, %v704
    %v706 = vlaneseq
    %v707 = vshrl.u32 %v706, 7
    %v708 = vsub.s32 6, %v707
    %v709 = vrot.slane %v198, %v708
    %v710 = vlaneseq
    %v711 = vshrl.u32 %v710, 7
    %v712 = vsub.s32 7, %v711
    %v713 = vrot.slane %v198, %v712
    %v714 = vlaneseq
    %v715 = vshrl.u32 %v714, 7
    %v716 = vsub.s32 0, %v715
    %v717 = vrot.slane %v201, %v716
    %v718 = vlaneseq
    %v719 = vshrl.u32 %v718, 7
    %v720 = vsub.s32 1, %v719
    %v721 = vrot.slane %v201, %v720
    %v722 = vlaneseq
    %v723 = vshrl.u32 %v722, 7
    %v724 = vsub.s32 2, %v723
    %v725 = vrot.slane %v201, %v724
    %v726 = vlaneseq
    %v727 = vshrl.u32 %v726, 7
    %v728 = vsub.s32 3, %v727
    %v729 = vrot.slane %v201, %v728
    %v730 = vlaneseq
    %v731 = vshrl.u32 %v730, 7
    %v732 = vsub.s32 4, %v731
    %v733 = vrot.slane %v201, %v732
    %v734 = vlaneseq
    %v735 = vshrl.u32 %v734, 7
    %v736 = vsub.s32 5, %v735
    %v737 = vrot.slane %v201, %v736
    %v738 = vlaneseq
    %v739 = vshrl.u32 %v738, 7
    %v740 = vsub.s32 6, %v739
    %v741 = vrot.slane %v201, %v740
    %v742 = vlaneseq
    %v743 = vshrl.u32 %v742, 7
    %v744 = vsub.s32 7, %v743
    %v745 = vrot.slane %v201, %v744
    %v746 = vlaneseq
    %v747 = vshrl.u32 %v746, 7
    %v748 = vsub.s32 0, %v747
    %v749 = vrot.slane %v204, %v748
    %v750 = vlaneseq
    %v751 = vshrl.u32 %v750, 7
    %v752 = vsub.s32 1, %v751
    %v753 = vrot.slane %v204, %v752
    %v754 = vlaneseq
    %v755 = vshrl.u32 %v754, 7
    %v756 = vsub.s32 2, %v755
    %v757 = vrot.slane %v204, %v756
    %v758 = vlaneseq
    %v759 = vshrl.u32 %v758, 7
    %v760 = vsub.s32 3, %v759
    %v761 = vrot.slane %v204, %v760
    %v762 = vlaneseq
    %v763 = vshrl.u32 %v762, 7
    %v764 = vsub.s32 4, %v763
    %v765 = vrot.slane %v204, %v764
    %v766 = vlaneseq
    %v767 = vshrl.u32 %v766, 7
    %v768 = vsub.s32 5, %v767
    %v769 = vrot.slane %v204, %v768
    %v770 = vlaneseq
    %v771 = vshrl.u32 %v770, 7
    %v772 = vsub.s32 6, %v771
    %v773 = vrot.slane %v204, %v772
    %v774 = vlaneseq
    %v775 = vshrl.u32 %v774, 7
    %v776 = vsub.s32 7, %v775
    %v777 = vrot.slane %v204, %v776
    %v778 = vlaneseq
    %v779 = vshrl.u32 %v778, 7
    %v780 = vsub.s32 0, %v779
    %v781 = vrot.slane %v207, %v780
    %v782 = vlaneseq
    %v783 = vshrl.u32 %v782, 7
    %v784 = vsub.s32 1, %v783
    %v785 = vrot.slane %v207, %v784
    %v786 = vlaneseq
    %v787 = vshrl.u32 %v786, 7
    %v788 = vsub.s32 2, %v787
    %v789 = vrot.slane %v207, %v788
    %v790 = vlaneseq
    %v791 = vshrl.u32 %v790, 7
    %v792 = vsub.s32 3, %v791
    %v793 = vrot.slane %v207, %v792
    %v794 = vlaneseq
    %v795 = vshrl.u32 %v794, 7
    %v796 = vsub.s32 4, %v795
    %v797 = vrot.slane %v207, %v796
    %v798 = vlaneseq
    %v799 = vshrl.u32 %v798, 7
    %v800 = vsub.s32 5, %v799
    %v801 = vrot.slane %v207, %v800
    %v802 = vlaneseq
    %v803 = vshrl.u32 %v802, 7
    %v804 = vsub.s32 6, %v803
    %v805 = vrot.slane %v207, %v804
    %v806 = vlaneseq
    %v807 = vshrl.u32 %v806, 7
    %v808 = vsub.s32 7, %v807
    %v809 = vrot.slane %v207, %v808
    %v810 = vlaneseq
    %v811 = vshrl.u32 %v810, 7
    %v812 = vsub.s32 0, %v811
    %v813 = vrot.slane %v210, %v812
    %v814 = vlaneseq
    %v815 = vshrl.u32 %v814, 7
    %v816 = vsub.s32 1, %v815
    %v817 = vrot.slane %v210, %v816
    %v818 = vlaneseq
    %v819 = vshrl.u32 %v818, 7
    %v820 = vsub.s32 2, %v819
    %v821 = vrot.slane %v210, %v820
    %v822 = vlaneseq
    %v823 = vshrl.u32 %v822, 7
    %v824 = vsub.s32 3, %v823
    %v825 = vrot.slane %v210, %v824
    %v826 = vlaneseq
    %v827 = vshrl.u32 %v826, 7
    %v828 = vsub.s32 4, %v827
    %v829 = vrot.slane %v210, %v828
    %v830 = vlaneseq
    %v831 = vshrl.u32 %v830, 7
    %v832 = vsub.s32 5, %v831
    %v833 = vrot.slane %v210, %v832
    %v834 = vlaneseq
    %v835 = vshrl.u32 %v834, 7
    %v836 = vsub.s32 6, %v835
    %v837 = vrot.slane %v210, %v836
    %v838 = vlaneseq
    %v839 = vshrl.u32 %v838, 7
    %v840 = vsub.s32 7, %v839
    %v841 = vrot.slane %v210, %v840
    %v842 = vlaneseq
    %v843 = vshrl.u32 %v842, 7
    %v844 = vsub.s32 0, %v843
    %v845 = vrot.slane %v213, %v844
    %v846 = vlaneseq
    %v847 = vshrl.u32 %v846, 7
    %v848 = vsub.s32 1, %v847
    %v849 = vrot.slane %v213, %v848
    %v850 = vlaneseq
    %v851 = vshrl.u32 %v850, 7
    %v852 = vsub.s32 2, %v851
    %v853 = vrot.slane %v213, %v852
    %v854 = vlaneseq
    %v855 = vshrl.u32 %v854, 7
    %v856 = vsub.s32 3, %v855
    %v857 = vrot.slane %v213, %v856
    %v858 = vlaneseq
    %v859 = vshrl.u32 %v858, 7
    %v860 = vsub.s32 4, %v859
    %v861 = vrot.slane %v213, %v860
    %v862 = vlaneseq
    %v863 = vshrl.u32 %v862, 7
    %v864 = vsub.s32 5, %v863
    %v865 = vrot.slane %v213, %v864
    %v866 = vlaneseq
    %v867 = vshrl.u32 %v866, 7
    %v868 = vsub.s32 6, %v867
    %v869 = vrot.slane %v213, %v868
    %v870 = vlaneseq
    %v871 = vshrl.u32 %v870, 7
    %v872 = vsub.s32 7, %v871
    %v873 = vrot.slane %v213, %v872
    %v874 = vlaneseq
    %v875 = vshrl.u32 %v874, 7
    %v876 = vsub.s32 0, %v875
    %v877 = vrot.slane %v216, %v876
    %v878 = vlaneseq
    %v879 = vshrl.u32 %v878, 7
    %v880 = vsub.s32 1, %v879
    %v881 = vrot.slane %v216, %v880
    %v882 = vlaneseq
    %v883 = vshrl.u32 %v882, 7
    %v884 = vsub.s32 2, %v883
    %v885 = vrot.slane %v216, %v884
    %v886 = vlaneseq
    %v887 = vshrl.u32 %v886, 7
    %v888 = vsub.s32 3, %v887
    %v889 = vrot.slane %v216, %v888
    %v890 = vlaneseq
    %v891 = vshrl.u32 %v890, 7
    %v892 = vsub.s32 4, %v891
    %v893 = vrot.slane %v216, %v892
    %v894 = vlaneseq
    %v895 = vshrl.u32 %v894, 7
    %v896 = vsub.s32 5, %v895
    %v897 = vrot.slane %v216, %v896
    %v898 = vlaneseq
    %v899 = vshrl.u32 %v898, 7
    %v900 = vsub.s32 6, %v899
    %v901 = vrot.slane %v216, %v900
    %v902 = vlaneseq
    %v903 = vshrl.u32 %v902, 7
    %v904 = vsub.s32 7, %v903
    %v905 = vrot.slane %v216, %v904
    %v906 = vcombine.low %v397, %v401
    %v907 = vcombine.low %v405, %v409
    %v908 = vcombine.low %v413, %v417
    %v909 = vcombine.low %v421, %v425
    %v911 = vunpack.c.l.s4 1966171168
    %v912 = vunpack.c.0.s8 %v911
    %v913 = vlaneseq
    %v914 = vshrl.u32 %v913, 7
    %v915 = vsub.s32 %v912, %v914
    %v916 = vrot.slane %v906, %v915
    %v918 = vunpack.c.l.s4 1966171168
    %v919 = vunpack.c.0.s8 %v918
    %v920 = vlaneseq
    %v921 = vshrl.u32 %v920, 7
    %v922 = vsub.s32 %v919, %v921
    %v923 = vrot.slane %v907, %v922
    %v925 = vunpack.c.l.s4 1966171168
    %v926 = vunpack.c.0.s8 %v925
    %v927 = vlaneseq
    %v928 = vshrl.u32 %v927, 7
    %v929 = vsub.s32 %v926, %v928
    %v930 = vrot.slane %v908, %v929
    %v932 = vunpack.c.l.s4 1966171168
    %v933 = vunpack.c.0.s8 %v932
    %v934 = vlaneseq
    %v935 = vshrl.u32 %v934, 7
    %v936 = vsub.s32 %v933, %v935
    %v937 = vrot.slane %v909, %v936
    %v938 = vcombine.low %v916, %v923
    %v939 = vcombine.low %v930, %v937
    %v941 = vunpack.c.l.s4 1966171168
    %v942 = vunpack.c.0.s8 %v941
    %v943 = vlaneseq
    %v944 = vshrl.u32 %v943, 7
    %v945 = vsub.s32 %v942, %v944
    %v946 = vrot.slane %v938, %v945
    %v948 = vunpack.c.l.s4 1966171168
    %v949 = vunpack.c.0.s8 %v948
    %v950 = vlaneseq
    %v951 = vshrl.u32 %v950, 7
    %v952 = vsub.s32 %v949, %v951
    %v953 = vrot.slane %v939, %v952
    %v954 = vcombine.low %v946, %v953
    %v955 = vcombine.low %v429, %v433
    %v956 = vcombine.low %v437, %v441
    %v957 = vcombine.low %v445, %v449
    %v958 = vcombine.low %v453, %v457
    %v960 = vunpack.c.l.s4 1966171168
    %v961 = vunpack.c.0.s8 %v960
    %v962 = vlaneseq
    %v963 = vshrl.u32 %v962, 7
    %v964 = vsub.s32 %v961, %v963
    %v965 = vrot.slane %v955, %v964
    %v967 = vunpack.c.l.s4 1966171168
    %v968 = vunpack.c.0.s8 %v967
    %v969 = vlaneseq
    %v970 = vshrl.u32 %v969, 7
    %v971 = vsub.s32 %v968, %v970
    %v972 = vrot.slane %v956, %v971
    %v974 = vunpack.c.l.s4 1966171168
    %v975 = vunpack.c.0.s8 %v974
    %v976 = vlaneseq
    %v977 = vshrl.u32 %v976, 7
    %v978 = vsub.s32 %v975, %v977
    %v979 = vrot.slane %v957, %v978
    %v981 = vunpack.c.l.s4 1966171168
    %v982 = vunpack.c.0.s8 %v981
    %v983 = vlaneseq
    %v984 = vshrl.u32 %v983, 7
    %v985 = vsub.s32 %v982, %v984
    %v986 = vrot.slane %v958, %v985
    %v987 = vcombine.low %v965, %v972
    %v988 = vcombine.low %v979, %v986
    %v990 = vunpack.c.l.s4 1966171168
    %v991 = vunpack.c.0.s8 %v990
    %v992 = vlaneseq
    %v993 = vshrl.u32 %v992, 7
    %v994 = vsub.s32 %v991, %v993
    %v995 = vrot.slane %v987, %v994
    %v997 = vunpack.c.l.s4 1966171168
    %v998 = vunpack.c.0.s8 %v997
    %v999 = vlaneseq
    %v1000 = vshrl.u32 %v999, 7
    %v1001 = vsub.s32 %v998, %v1000
    %v1002 = vrot.slane %v988, %v1001
    %v1003 = vcombine.low %v995, %v1002
    %v1004 = vcombine.low %v461, %v465
    %v1005 = vcombine.low %v469, %v473
    %v1006 = vcombine.low %v477, %v481
    %v1007 = vcombine.low %v485, %v489
    %v1009 = vunpack.c.l.s4 1966171168
    %v1010 = vunpack.c.0.s8 %v1009
    %v1011 = vlaneseq
    %v1012 = vshrl.u32 %v1011, 7
    %v1013 = vsub.s32 %v1010, %v1012
    %v1014 = vrot.slane %v1004, %v1013
    %v1016 = vunpack.c.l.s4 1966171168
    %v1017 = vunpack.c.0.s8 %v1016
    %v1018 = vlaneseq
    %v1019 = vshrl.u32 %v1018, 7
    %v1020 = vsub.s32 %v1017, %v1019
    %v1021 = vrot.slane %v1005, %v1020
    %v1023 = vunpack.c.l.s4 1966171168
    %v1024 = vunpack.c.0.s8 %v1023
    %v1025 = vlaneseq
    %v1026 = vshrl.u32 %v1025, 7
    %v1027 = vsub.s32 %v1024, %v1026
    %v1028 = vrot.slane %v1006, %v1027
    %v1030 = vunpack.c.l.s4 1966171168
    %v1031 = vunpack.c.0.s8 %v1030
    %v1032 = vlaneseq
    %v1033 = vshrl.u32 %v1032, 7
    %v1034 = vsub.s32 %v1031, %v1033
    %v1035 = vrot.slane %v1007, %v1034
    %v1036 = vcombine.low %v1014, %v1021
    %v1037 = vcombine.low %v1028, %v1035
    %v1039 = vunpack.c.l.s4 1966171168
    %v1040 = vunpack.c.0.s8 %v1039
    %v1041 = vlaneseq
    %v1042 = vshrl.u32 %v1041, 7
    %v1043 = vsub.s32 %v1040, %v1042
    %v1044 = vrot.slane %v1036, %v1043
    %v1046 = vunpack.c.l.s4 1966171168
    %v1047 = vunpack.c.0.s8 %v1046
    %v1048 = vlaneseq
    %v1049 = vshrl.u32 %v1048, 7
    %v1050 = vsub.s32 %v1047, %v1049
    %v1051 = vrot.slane %v1037, %v1050
    %v1052 = vcombine.low %v1044, %v1051
    %v1053 = vcombine.low %v493, %v497
    %v1054 = vcombine.low %v501, %v505
    %v1055 = vcombine.low %v509, %v513
    %v1056 = vcombine.low %v517, %v521
    %v1058 = vunpack.c.l.s4 1966171168
    %v1059 = vunpack.c.0.s8 %v1058
    %v1060 = vlaneseq
    %v1061 = vshrl.u32 %v1060, 7
    %v1062 = vsub.s32 %v1059, %v1061
    %v1063 = vrot.slane %v1053, %v1062
    %v1065 = vunpack.c.l.s4 1966171168
    %v1066 = vunpack.c.0.s8 %v1065
    %v1067 = vlaneseq
    %v1068 = vshrl.u32 %v1067, 7
    %v1069 = vsub.s32 %v1066, %v1068
    %v1070 = vrot.slane %v1054, %v1069
    %v1072 = vunpack.c.l.s4 1966171168
    %v1073 = vunpack.c.0.s8 %v1072
    %v1074 = vlaneseq
    %v1075 = vshrl.u32 %v1074, 7
    %v1076 = vsub.s32 %v1073, %v1075
    %v1077 = vrot.slane %v1055, %v1076
    %v1079 = vunpack.c.l.s4 1966171168
    %v1080 = vunpack.c.0.s8 %v1079
    %v1081 = vlaneseq
    %v1082 = vshrl.u32 %v1081, 7
    %v1083 = vsub.s32 %v1080, %v1082
    %v1084 = vrot.slane %v1056, %v1083
    %v1085 = vcombine.low %v1063, %v1070
    %v1086 = vcombine.low %v1077, %v1084
    %v1088 = vunpack.c.l.s4 1966171168
    %v1089 = vunpack.c.0.s8 %v1088
    %v1090 = vlaneseq
    %v1091 = vshrl.u32 %v1090, 7
    %v1092 = vsub.s32 %v1089, %v1091
    %v1093 = vrot.slane %v1085, %v1092
    %v1095 = vunpack.c.l.s4 1966171168
    %v1096 = vunpack.c.0.s8 %v1095
    %v1097 = vlaneseq
    %v1098 = vshrl.u32 %v1097, 7
    %v1099 = vsub.s32 %v1096, %v1098
    %v1100 = vrot.slane %v1086, %v1099
    %v1101 = vcombine.low %v1093, %v1100
    %v1102 = vcombine.low %v525, %v529
    %v1103 = vcombine.low %v533, %v537
    %v1104 = vcombine.low %v541, %v545
    %v1105 = vcombine.low %v549, %v553
    %v1107 = vunpack.c.l.s4 1966171168
    %v1108 = vunpack.c.0.s8 %v1107
    %v1109 = vlaneseq
    %v1110 = vshrl.u32 %v1109, 7
    %v1111 = vsub.s32 %v1108, %v1110
    %v1112 = vrot.slane %v1102, %v1111
    %v1114 = vunpack.c.l.s4 1966171168
    %v1115 = vunpack.c.0.s8 %v1114
    %v1116 = vlaneseq
    %v1117 = vshrl.u32 %v1116, 7
    %v1118 = vsub.s32 %v1115, %v1117
    %v1119 = vrot.slane %v1103, %v1118
    %v1121 = vunpack.c.l.s4 1966171168
    %v1122 = vunpack.c.0.s8 %v1121
    %v1123 = vlaneseq
    %v1124 = vshrl.u32 %v1123, 7
    %v1125 = vsub.s32 %v1122, %v1124
    %v1126 = vrot.slane %v1104, %v1125
    %v1128 = vunpack.c.l.s4 1966171168
    %v1129 = vunpack.c.0.s8 %v1128
    %v1130 = vlaneseq
    %v1131 = vshrl.u32 %v1130, 7
    %v1132 = vsub.s32 %v1129, %v1131
    %v1133 = vrot.slane %v1105, %v1132
    %v1134 = vcombine.low %v1112, %v1119
    %v1135 = vcombine.low %v1126, %v1133
    %v1137 = vunpack.c.l.s4 1966171168
    %v1138 = vunpack.c.0.s8 %v1137
    %v1139 = vlaneseq
    %v1140 = vshrl.u32 %v1139, 7
    %v1141 = vsub.s32 %v1138, %v1140
    %v1142 = vrot.slane %v1134, %v1141
    %v1144 = vunpack.c.l.s4 1966171168
    %v1145 = vunpack.c.0.s8 %v1144
    %v1146 = vlaneseq
    %v1147 = vshrl.u32 %v1146, 7
    %v1148 = vsub.s32 %v1145, %v1147
    %v1149 = vrot.slane %v1135, %v1148
    %v1150 = vcombine.low %v1142, %v1149
    %v1151 = vcombine.low %v557, %v561
    %v1152 = vcombine.low %v565, %v569
    %v1153 = vcombine.low %v573, %v577
    %v1154 = vcombine.low %v581, %v585
    %v1156 = vunpack.c.l.s4 1966171168
    %v1157 = vunpack.c.0.s8 %v1156
    %v1158 = vlaneseq
    %v1159 = vshrl.u32 %v1158, 7
    %v1160 = vsub.s32 %v1157, %v1159
    %v1161 = vrot.slane %v1151, %v1160
    %v1163 = vunpack.c.l.s4 1966171168
    %v1164 = vunpack.c.0.s8 %v1163
    %v1165 = vlaneseq
    %v1166 = vshrl.u32 %v1165, 7
    %v1167 = vsub.s32 %v1164, %v1166
    %v1168 = vrot.slane %v1152, %v1167
    %v1170 = vunpack.c.l.s4 1966171168
    %v1171 = vunpack.c.0.s8 %v1170
    %v1172 = vlaneseq
    %v1173 = vshrl.u32 %v1172, 7
    %v1174 = vsub.s32 %v1171, %v1173
    %v1175 = vrot.slane %v1153, %v1174
    %v1177 = vunpack.c.l.s4 1966171168
    %v1178 = vunpack.c.0.s8 %v1177
    %v1179 = vlaneseq
    %v1180 = vshrl.u32 %v1179, 7
    %v1181 = vsub.s32 %v1178, %v1180
    %v1182 = vrot.slane %v1154, %v1181
    %v1183 = vcombine.low %v1161, %v1168
    %v1184 = vcombine.low %v1175, %v1182
    %v1186 = vunpack.c.l.s4 1966171168
    %v1187 = vunpack.c.0.s8 %v1186
    %v1188 = vlaneseq
    %v1189 = vshrl.u32 %v1188, 7
    %v1190 = vsub.s32 %v1187, %v1189
    %v1191 = vrot.slane %v1183, %v1190
    %v1193 = vunpack.c.l.s4 1966171168
    %v1194 = vunpack.c.0.s8 %v1193
    %v1195 = vlaneseq
    %v1196 = vshrl.u32 %v1195, 7
    %v1197 = vsub.s32 %v1194, %v1196
    %v1198 = vrot.slane %v1184, %v1197
    %v1199 = vcombine.low %v1191, %v1198
    %v1200 = vcombine.low %v589, %v593
    %v1201 = vcombine.low %v597, %v601
    %v1202 = vcombine.low %v605, %v609
    %v1203 = vcombine.low %v613, %v617
    %v1205 = vunpack.c.l.s4 1966171168
    %v1206 = vunpack.c.0.s8 %v1205
    %v1207 = vlaneseq
    %v1208 = vshrl.u32 %v1207, 7
    %v1209 = vsub.s32 %v1206, %v1208
    %v1210 = vrot.slane %v1200, %v1209
    %v1212 = vunpack.c.l.s4 1966171168
    %v1213 = vunpack.c.0.s8 %v1212
    %v1214 = vlaneseq
    %v1215 = vshrl.u32 %v1214, 7
    %v1216 = vsub.s32 %v1213, %v1215
    %v1217 = vrot.slane %v1201, %v1216
    %v1219 = vunpack.c.l.s4 1966171168
    %v1220 = vunpack.c.0.s8 %v1219
    %v1221 = vlaneseq
    %v1222 = vshrl.u32 %v1221, 7
    %v1223 = vsub.s32 %v1220, %v1222
    %v1224 = vrot.slane %v1202, %v1223
    %v1226 = vunpack.c.l.s4 1966171168
    %v1227 = vunpack.c.0.s8 %v1226
    %v1228 = vlaneseq
    %v1229 = vshrl.u32 %v1228, 7
    %v1230 = vsub.s32 %v1227, %v1229
    %v1231 = vrot.slane %v1203, %v1230
    %v1232 = vcombine.low %v1210, %v1217
    %v1233 = vcombine.low %v1224, %v1231
    %v1235 = vunpack.c.l.s4 1966171168
    %v1236 = vunpack.c.0.s8 %v1235
    %v1237 = vlaneseq
    %v1238 = vshrl.u32 %v1237, 7
    %v1239 = vsub.s32 %v1236, %v1238
    %v1240 = vrot.slane %v1232, %v1239
    %v1242 = vunpack.c.l.s4 1966171168
    %v1243 = vunpack.c.0.s8 %v1242
    %v1244 = vlaneseq
    %v1245 = vshrl.u32 %v1244, 7
    %v1246 = vsub.s32 %v1243, %v1245
    %v1247 = vrot.slane %v1233, %v1246
    %v1248 = vcombine.low %v1240, %v1247
    %v1249 = vcombine.low %v621, %v625
    %v1250 = vcombine.low %v629, %v633
    %v1251 = vcombine.low %v637, %v641
    %v1252 = vcombine.low %v645, %v649
    %v1254 = vunpack.c.l.s4 1966171168
    %v1255 = vunpack.c.0.s8 %v1254
    %v1256 = vlaneseq
    %v1257 = vshrl.u32 %v1256, 7
    %v1258 = vsub.s32 %v1255, %v1257
    %v1259 = vrot.slane %v1249, %v1258
    %v1261 = vunpack.c.l.s4 1966171168
    %v1262 = vunpack.c.0.s8 %v1261
    %v1263 = vlaneseq
    %v1264 = vshrl.u32 %v1263, 7
    %v1265 = vsub.s32 %v1262, %v1264
    %v1266 = vrot.slane %v1250, %v1265
    %v1268 = vunpack.c.l.s4 1966171168
    %v1269 = vunpack.c.0.s8 %v1268
    %v1270 = vlaneseq
    %v1271 = vshrl.u32 %v1270, 7
    %v1272 = vsub.s32 %v1269, %v1271
    %v1273 = vrot.slane %v1251, %v1272
    %v1275 = vunpack.c.l.s4 1966171168
    %v1276 = vunpack.c.0.s8 %v1275
    %v1277 = vlaneseq
    %v1278 = vshrl.u32 %v1277, 7
    %v1279 = vsub.s32 %v1276, %v1278
    %v1280 = vrot.slane %v1252, %v1279
    %v1281 = vcombine.low %v1259, %v1266
    %v1282 = vcombine.low %v1273, %v1280
    %v1284 = vunpack.c.l.s4 1966171168
    %v1285 = vunpack.c.0.s8 %v1284
    %v1286 = vlaneseq
    %v1287 = vshrl.u32 %v1286, 7
    %v1288 = vsub.s32 %v1285, %v1287
    %v1289 = vrot.slane %v1281, %v1288
    %v1291 = vunpack.c.l.s4 1966171168
    %v1292 = vunpack.c.0.s8 %v1291
    %v1293 = vlaneseq
    %v1294 = vshrl.u32 %v1293, 7
    %v1295 = vsub.s32 %v1292, %v1294
    %v1296 = vrot.slane %v1282, %v1295
    %v1297 = vcombine.low %v1289, %v1296
    %v1298 = vcombine.low %v653, %v657
    %v1299 = vcombine.low %v661, %v665
    %v1300 = vcombine.low %v669, %v673
    %v1301 = vcombine.low %v677, %v681
    %v1303 = vunpack.c.l.s4 1966171168
    %v1304 = vunpack.c.0.s8 %v1303
    %v1305 = vlaneseq
    %v1306 = vshrl.u32 %v1305, 7
    %v1307 = vsub.s32 %v1304, %v1306
    %v1308 = vrot.slane %v1298, %v1307
    %v1310 = vunpack.c.l.s4 1966171168
    %v1311 = vunpack.c.0.s8 %v1310
    %v1312 = vlaneseq
    %v1313 = vshrl.u32 %v1312, 7
    %v1314 = vsub.s32 %v1311, %v1313
    %v1315 = vrot.slane %v1299, %v1314
    %v1317 = vunpack.c.l.s4 1966171168
    %v1318 = vunpack.c.0.s8 %v1317
    %v1319 = vlaneseq
    %v1320 = vshrl.u32 %v1319, 7
    %v1321 = vsub.s32 %v1318, %v1320
    %v1322 = vrot.slane %v1300, %v1321
    %v1324 = vunpack.c.l.s4 1966171168
    %v1325 = vunpack.c.0.s8 %v1324
    %v1326 = vlaneseq
    %v1327 = vshrl.u32 %v1326, 7
    %v1328 = vsub.s32 %v1325, %v1327
    %v1329 = vrot.slane %v1301, %v1328
    %v1330 = vcombine.low %v1308, %v1315
    %v1331 = vcombine.low %v1322, %v1329
    %v1333 = vunpack.c.l.s4 1966171168
    %v1334 = vunpack.c.0.s8 %v1333
    %v1335 = vlaneseq
    %v1336 = vshrl.u32 %v1335, 7
    %v1337 = vsub.s32 %v1334, %v1336
    %v1338 = vrot.slane %v1330, %v1337
    %v1340 = vunpack.c.l.s4 1966171168
    %v1341 = vunpack.c.0.s8 %v1340
    %v1342 = vlaneseq
    %v1343 = vshrl.u32 %v1342, 7
    %v1344 = vsub.s32 %v1341, %v1343
    %v1345 = vrot.slane %v1331, %v1344
    %v1346 = vcombine.low %v1338, %v1345
    %v1347 = vcombine.low %v685, %v689
    %v1348 = vcombine.low %v693, %v697
    %v1349 = vcombine.low %v701, %v705
    %v1350 = vcombine.low %v709, %v713
    %v1352 = vunpack.c.l.s4 1966171168
    %v1353 = vunpack.c.0.s8 %v1352
    %v1354 = vlaneseq
    %v1355 = vshrl.u32 %v1354, 7
    %v1356 = vsub.s32 %v1353, %v1355
    %v1357 = vrot.slane %v1347, %v1356
    %v1359 = vunpack.c.l.s4 1966171168
    %v1360 = vunpack.c.0.s8 %v1359
    %v1361 = vlaneseq
    %v1362 = vshrl.u32 %v1361, 7
    %v1363 = vsub.s32 %v1360, %v1362
    %v1364 = vrot.slane %v1348, %v1363
    %v1366 = vunpack.c.l.s4 1966171168
    %v1367 = vunpack.c.0.s8 %v1366
    %v1368 = vlaneseq
    %v1369 = vshrl.u32 %v1368, 7
    %v1370 = vsub.s32 %v1367, %v1369
    %v1371 = vrot.slane %v1349, %v1370
    %v1373 = vunpack.c.l.s4 1966171168
    %v1374 = vunpack.c.0.s8 %v1373
    %v1375 = vlaneseq
    %v1376 = vshrl.u32 %v1375, 7
    %v1377 = vsub.s32 %v1374, %v1376
    %v1378 = vrot.slane %v1350, %v1377
    %v1379 = vcombine.low %v1357, %v1364
    %v1380 = vcombine.low %v1371, %v1378
    %v1382 = vunpack.c.l.s4 1966171168
    %v1383 = vunpack.c.0.s8 %v1382
    %v1384 = vlaneseq
    %v1385 = vshrl.u32 %v1384, 7
    %v1386 = vsub.s32 %v1383, %v1385
    %v1387 = vrot.slane %v1379, %v1386
    %v1389 = vunpack.c.l.s4 1966171168
    %v1390 = vunpack.c.0.s8 %v1389
    %v1391 = vlaneseq
    %v1392 = vshrl.u32 %v1391, 7
    %v1393 = vsub.s32 %v1390, %v1392
    %v1394 = vrot.slane %v1380, %v1393
    %v1395 = vcombine.low %v1387, %v1394
    %v1396 = vcombine.low %v717, %v721
    %v1397 = vcombine.low %v725, %v729
    %v1398 = vcombine.low %v733, %v737
    %v1399 = vcombine.low %v741, %v745
    %v1401 = vunpack.c.l.s4 1966171168
    %v1402 = vunpack.c.0.s8 %v1401
    %v1403 = vlaneseq
    %v1404 = vshrl.u32 %v1403, 7
    %v1405 = vsub.s32 %v1402, %v1404
    %v1406 = vrot.slane %v1396, %v1405
    %v1408 = vunpack.c.l.s4 1966171168
    %v1409 = vunpack.c.0.s8 %v1408
    %v1410 = vlaneseq
    %v1411 = vshrl.u32 %v1410, 7
    %v1412 = vsub.s32 %v1409, %v1411
    %v1413 = vrot.slane %v1397, %v1412
    %v1415 = vunpack.c.l.s4 1966171168
    %v1416 = vunpack.c.0.s8 %v1415
    %v1417 = vlaneseq
    %v1418 = vshrl.u32 %v1417, 7
    %v1419 = vsub.s32 %v1416, %v1418
    %v1420 = vrot.slane %v1398, %v1419
    %v1422 = vunpack.c.l.s4 1966171168
    %v1423 = vunpack.c.0.s8 %v1422
    %v1424 = vlaneseq
    %v1425 = vshrl.u32 %v1424, 7
    %v1426 = vsub.s32 %v1423, %v1425
    %v1427 = vrot.slane %v1399, %v1426
    %v1428 = vcombine.low %v1406, %v1413
    %v1429 = vcombine.low %v1420, %v1427
    %v1431 = vunpack.c.l.s4 1966171168
    %v1432 = vunpack.c.0.s8 %v1431
    %v1433 = vlaneseq
    %v1434 = vshrl.u32 %v1433, 7
    %v1435 = vsub.s32 %v1432, %v1434
    %v1436 = vrot.slane %v1428, %v1435
    %v1438 = vunpack.c.l.s4 1966171168
    %v1439 = vunpack.c.0.s8 %v1438
    %v1440 = vlaneseq
    %v1441 = vshrl.u32 %v1440, 7
    %v1442 = vsub.s32 %v1439, %v1441
    %v1443 = vrot.slane %v1429, %v1442
    %v1444 = vcombine.low %v1436, %v1443
    %v1445 = vcombine.low %v749, %v753
    %v1446 = vcombine.low %v757, %v761
    %v1447 = vcombine.low %v765, %v769
    %v1448 = vcombine.low %v773, %v777
    %v1450 = vunpack.c.l.s4 1966171168
    %v1451 = vunpack.c.0.s8 %v1450
    %v1452 = vlaneseq
    %v1453 = vshrl.u32 %v1452, 7
    %v1454 = vsub.s32 %v1451, %v1453
    %v1455 = vrot.slane %v1445, %v1454
    %v1457 = vunpack.c.l.s4 1966171168
    %v1458 = vunpack.c.0.s8 %v1457
    %v1459 = vlaneseq
    %v1460 = vshrl.u32 %v1459, 7
    %v1461 = vsub.s32 %v1458, %v1460
    %v1462 = vrot.slane %v1446, %v1461
    %v1464 = vunpack.c.l.s4 1966171168
    %v1465 = vunpack.c.0.s8 %v1464
    %v1466 = vlaneseq
    %v1467 = vshrl.u32 %v1466, 7
    %v1468 = vsub.s32 %v1465, %v1467
    %v1469 = vrot.slane %v1447, %v1468
    %v1471 = vunpack.c.l.s4 1966171168
    %v1472 = vunpack.c.0.s8 %v1471
    %v1473 = vlaneseq
    %v1474 = vshrl.u32 %v1473, 7
    %v1475 = vsub.s32 %v1472, %v1474
    %v1476 = vrot.slane %v1448, %v1475
    %v1477 = vcombine.low %v1455, %v1462
    %v1478 = vcombine.low %v1469, %v1476
    %v1480 = vunpack.c.l.s4 1966171168
    %v1481 = vunpack.c.0.s8 %v1480
    %v1482 = vlaneseq
    %v1483 = vshrl.u32 %v1482, 7
    %v1484 = vsub.s32 %v1481, %v1483
    %v1485 = vrot.slane %v1477, %v1484
    %v1487 = vunpack.c.l.s4 1966171168
    %v1488 = vunpack.c.0.s8 %v1487
    %v1489 = vlaneseq
    %v1490 = vshrl.u32 %v1489, 7
    %v1491 = vsub.s32 %v1488, %v1490
    %v1492 = vrot.slane %v1478, %v1491
    %v1493 = vcombine.low %v1485, %v1492
    %v1494 = vcombine.low %v781, %v785
    %v1495 = vcombine.low %v789, %v793
    %v1496 = vcombine.low %v797, %v801
    %v1497 = vcombine.low %v805, %v809
    %v1499 = vunpack.c.l.s4 1966171168
    %v1500 = vunpack.c.0.s8 %v1499
    %v1501 = vlaneseq
    %v1502 = vshrl.u32 %v1501, 7
    %v1503 = vsub.s32 %v1500, %v1502
    %v1504 = vrot.slane %v1494, %v1503
    %v1506 = vunpack.c.l.s4 1966171168
    %v1507 = vunpack.c.0.s8 %v1506
    %v1508 = vlaneseq
    %v1509 = vshrl.u32 %v1508, 7
    %v1510 = vsub.s32 %v1507, %v1509
    %v1511 = vrot.slane %v1495, %v1510
    %v1513 = vunpack.c.l.s4 1966171168
    %v1514 = vunpack.c.0.s8 %v1513
    %v1515 = vlaneseq
    %v1516 = vshrl.u32 %v1515, 7
    %v1517 = vsub.s32 %v1514, %v1516
    %v1518 = vrot.slane %v1496, %v1517
    %v1520 = vunpack.c.l.s4 1966171168
    %v1521 = vunpack.c.0.s8 %v1520
    %v1522 = vlaneseq
    %v1523 = vshrl.u32 %v1522, 7
    %v1524 = vsub.s32 %v1521, %v1523
    %v1525 = vrot.slane %v1497, %v1524
    %v1526 = vcombine.low %v1504, %v1511
    %v1527 = vcombine.low %v1518, %v1525
    %v1529 = vunpack.c.l.s4 1966171168
    %v1530 = vunpack.c.0.s8 %v1529
    %v1531 = vlaneseq
    %v1532 = vshrl.u32 %v1531, 7
    %v1533 = vsub.s32 %v1530, %v1532
    %v1534 = vrot.slane %v1526, %v1533
    %v1536 = vunpack.c.l.s4 1966171168
    %v1537 = vunpack.c.0.s8 %v1536
    %v1538 = vlaneseq
    %v1539 = vshrl.u32 %v1538, 7
    %v1540 = vsub.s32 %v1537, %v1539
    %v1541 = vrot.slane %v1527, %v1540
    %v1542 = vcombine.low %v1534, %v1541
    %v1543 = vcombine.low %v813, %v817
    %v1544 = vcombine.low %v821, %v825
    %v1545 = vcombine.low %v829, %v833
    %v1546 = vcombine.low %v837, %v841
    %v1548 = vunpack.c.l.s4 1966171168
    %v1549 = vunpack.c.0.s8 %v1548
    %v1550 = vlaneseq
    %v1551 = vshrl.u32 %v1550, 7
    %v1552 = vsub.s32 %v1549, %v1551
    %v1553 = vrot.slane %v1543, %v1552
    %v1555 = vunpack.c.l.s4 1966171168
    %v1556 = vunpack.c.0.s8 %v1555
    %v1557 = vlaneseq
    %v1558 = vshrl.u32 %v1557, 7
    %v1559 = vsub.s32 %v1556, %v1558
    %v1560 = vrot.slane %v1544, %v1559
    %v1562 = vunpack.c.l.s4 1966171168
    %v1563 = vunpack.c.0.s8 %v1562
    %v1564 = vlaneseq
    %v1565 = vshrl.u32 %v1564, 7
    %v1566 = vsub.s32 %v1563, %v1565
    %v1567 = vrot.slane %v1545, %v1566
    %v1569 = vunpack.c.l.s4 1966171168
    %v1570 = vunpack.c.0.s8 %v1569
    %v1571 = vlaneseq
    %v1572 = vshrl.u32 %v1571, 7
    %v1573 = vsub.s32 %v1570, %v1572
    %v1574 = vrot.slane %v1546, %v1573
    %v1575 = vcombine.low %v1553, %v1560
    %v1576 = vcombine.low %v1567, %v1574
    %v1578 = vunpack.c.l.s4 1966171168
    %v1579 = vunpack.c.0.s8 %v1578
    %v1580 = vlaneseq
    %v1581 = vshrl.u32 %v1580, 7
    %v1582 = vsub.s32 %v1579, %v1581
    %v1583 = vrot.slane %v1575, %v1582
    %v1585 = vunpack.c.l.s4 1966171168
    %v1586 = vunpack.c.0.s8 %v1585
    %v1587 = vlaneseq
    %v1588 = vshrl.u32 %v1587, 7
    %v1589 = vsub.s32 %v1586, %v1588
    %v1590 = vrot.slane %v1576, %v1589
    %v1591 = vcombine.low %v1583, %v1590
    %v1592 = vcombine.low %v845, %v849
    %v1593 = vcombine.low %v853, %v857
    %v1594 = vcombine.low %v861, %v865
    %v1595 = vcombine.low %v869, %v873
    %v1597 = vunpack.c.l.s4 1966171168
    %v1598 = vunpack.c.0.s8 %v1597
    %v1599 = vlaneseq
    %v1600 = vshrl.u32 %v1599, 7
    %v1601 = vsub.s32 %v1598, %v1600
    %v1602 = vrot.slane %v1592, %v1601
    %v1604 = vunpack.c.l.s4 1966171168
    %v1605 = vunpack.c.0.s8 %v1604
    %v1606 = vlaneseq
    %v1607 = vshrl.u32 %v1606, 7
    %v1608 = vsub.s32 %v1605, %v1607
    %v1609 = vrot.slane %v1593, %v1608
    %v1611 = vunpack.c.l.s4 1966171168
    %v1612 = vunpack.c.0.s8 %v1611
    %v1613 = vlaneseq
    %v1614 = vshrl.u32 %v1613, 7
    %v1615 = vsub.s32 %v1612, %v1614
    %v1616 = vrot.slane %v1594, %v1615
    %v1618 = vunpack.c.l.s4 1966171168
    %v1619 = vunpack.c.0.s8 %v1618
    %v1620 = vlaneseq
    %v1621 = vshrl.u32 %v1620, 7
    %v1622 = vsub.s32 %v1619, %v1621
    %v1623 = vrot.slane %v1595, %v1622
    %v1624 = vcombine.low %v1602, %v1609
    %v1625 = vcombine.low %v1616, %v1623
    %v1627 = vunpack.c.l.s4 1966171168
    %v1628 = vunpack.c.0.s8 %v1627
    %v1629 = vlaneseq
    %v1630 = vshrl.u32 %v1629, 7
    %v1631 = vsub.s32 %v1628, %v1630
    %v1632 = vrot.slane %v1624, %v1631
    %v1634 = vunpack.c.l.s4 1966171168
    %v1635 = vunpack.c.0.s8 %v1634
    %v1636 = vlaneseq
    %v1637 = vshrl.u32 %v1636, 7
    %v1638 = vsub.s32 %v1635, %v1637
    %v1639 = vrot.slane %v1625, %v1638
    %v1640 = vcombine.low %v1632, %v1639
    %v1641 = vcombine.low %v877, %v881
    %v1642 = vcombine.low %v885, %v889
    %v1643 = vcombine.low %v893, %v897
    %v1644 = vcombine.low %v901, %v905
    %v1646 = vunpack.c.l.s4 1966171168
    %v1647 = vunpack.c.0.s8 %v1646
    %v1648 = vlaneseq
    %v1649 = vshrl.u32 %v1648, 7
    %v1650 = vsub.s32 %v1647, %v1649
    %v1651 = vrot.slane %v1641, %v1650
    %v1653 = vunpack.c.l.s4 1966171168
    %v1654 = vunpack.c.0.s8 %v1653
    %v1655 = vlaneseq
    %v1656 = vshrl.u32 %v1655, 7
    %v1657 = vsub.s32 %v1654, %v1656
    %v1658 = vrot.slane %v1642, %v1657
    %v1660 = vunpack.c.l.s4 1966171168
    %v1661 = vunpack.c.0.s8 %v1660
    %v1662 = vlaneseq
    %v1663 = vshrl.u32 %v1662, 7
    %v1664 = vsub.s32 %v1661, %v1663
    %v1665 = vrot.slane %v1643, %v1664
    %v1667 = vunpack.c.l.s4 1966171168
    %v1668 = vunpack.c.0.s8 %v1667
    %v1669 = vlaneseq
    %v1670 = vshrl.u32 %v1669, 7
    %v1671 = vsub.s32 %v1668, %v1670
    %v1672 = vrot.slane %v1644, %v1671
    %v1673 = vcombine.low %v1651, %v1658
    %v1674 = vcombine.low %v1665, %v1672
    %v1676 = vunpack.c.l.s4 1966171168
    %v1677 = vunpack.c.0.s8 %v1676
    %v1678 = vlaneseq
    %v1679 = vshrl.u32 %v1678, 7
    %v1680 = vsub.s32 %v1677, %v1679
    %v1681 = vrot.slane %v1673, %v1680
    %v1683 = vunpack.c.l.s4 1966171168
    %v1684 = vunpack.c.0.s8 %v1683
    %v1685 = vlaneseq
    %v1686 = vshrl.u32 %v1685, 7
    %v1687 = vsub.s32 %v1684, %v1686
    %v1688 = vrot.slane %v1674, %v1687
    %v1689 = vcombine.low %v1681, %v1688
    %1690 = vset.pattern.permute.xlu0 0
    %1691 = vperm.xlu0 %1690, %v954
    %v1692 = vpop.permute.xlu0 %1691
    %1693 = vset.pattern.permute.xlu0 0
    %1694 = vperm.xlu0 %1693, %v1003
    %v1695 = vpop.permute.xlu0 %1694
    %1696 = vset.pattern.permute.xlu0 0
    %1697 = vperm.xlu0 %1696, %v1052
    %v1698 = vpop.permute.xlu0 %1697
    %1699 = vset.pattern.permute.xlu0 0
    %1700 = vperm.xlu0 %1699, %v1101
    %v1701 = vpop.permute.xlu0 %1700
    %1702 = vset.pattern.permute.xlu0 0
    %1703 = vperm.xlu0 %1702, %v1150
    %v1704 = vpop.permute.xlu0 %1703
    %1705 = vset.pattern.permute.xlu0 0
    %1706 = vperm.xlu0 %1705, %v1199
    %v1707 = vpop.permute.xlu0 %1706
    %1708 = vset.pattern.permute.xlu0 0
    %1709 = vperm.xlu0 %1708, %v1248
    %v1710 = vpop.permute.xlu0 %1709
    %1711 = vset.pattern.permute.xlu0 0
    %1712 = vperm.xlu0 %1711, %v1297
    %v1713 = vpop.permute.xlu0 %1712
    %1714 = vset.pattern.permute.xlu0 0
    %1715 = vperm.xlu0 %1714, %v1346
    %v1716 = vpop.permute.xlu0 %1715
    %1717 = vset.pattern.permute.xlu0 0
    %1718 = vperm.xlu0 %1717, %v1395
    %v1719 = vpop.permute.xlu0 %1718
    %1720 = vset.pattern.permute.xlu0 0
    %1721 = vperm.xlu0 %1720, %v1444
    %v1722 = vpop.permute.xlu0 %1721
    %1723 = vset.pattern.permute.xlu0 0
    %1724 = vperm.xlu0 %1723, %v1493
    %v1725 = vpop.permute.xlu0 %1724
    %1726 = vset.pattern.permute.xlu0 0
    %1727 = vperm.xlu0 %1726, %v1542
    %v1728 = vpop.permute.xlu0 %1727
    %1729 = vset.pattern.permute.xlu0 0
    %1730 = vperm.xlu0 %1729, %v1591
    %v1731 = vpop.permute.xlu0 %1730
    %1732 = vset.pattern.permute.xlu0 0
    %1733 = vperm.xlu0 %1732, %v1640
    %v1734 = vpop.permute.xlu0 %1733
    %1735 = vset.pattern.permute.xlu0 0
    %1736 = vperm.xlu0 %1735, %v1689
    %v1737 = vpop.permute.xlu0 %1736
    %v1738 = vlaneseq
    %v1739 = vand.u32 %v1738, 127
    %v1740 = vlaneseq
    %v1741 = vshrl.u32 %v1740, 7
    %v1742 = vsub.s32 %v1739, %v1741
    %v1743 = vrot.slane %v1692, %v1742
    %v1744 = vadd.s32 %v1739, 4294967288
    %v1745 = vlaneseq
    %v1746 = vshrl.u32 %v1745, 7
    %v1747 = vsub.s32 %v1744, %v1746
    %v1748 = vrot.slane %v1695, %v1747
    %vm1749 = vcmask 130112
    %v1750 = vsel %vm1749, %v1748, %v1743
    %v1751 = vadd.s32 %v1739, 4294967280
    %v1752 = vlaneseq
    %v1753 = vshrl.u32 %v1752, 7
    %v1754 = vsub.s32 %v1751, %v1753
    %v1755 = vrot.slane %v1698, %v1754
    %vm1756 = vcmask 195712
    %v1757 = vsel %vm1756, %v1755, %v1750
    %v1758 = vadd.s32 %v1739, 4294967272
    %v1759 = vlaneseq
    %v1760 = vshrl.u32 %v1759, 7
    %v1761 = vsub.s32 %v1758, %v1760
    %v1762 = vrot.slane %v1701, %v1761
    %vm1763 = vcmask 261312
    %v1764 = vsel %vm1763, %v1762, %v1757
    %v1765 = vadd.s32 %v1739, 4294967264
    %v1766 = vlaneseq
    %v1767 = vshrl.u32 %v1766, 7
    %v1768 = vsub.s32 %v1765, %v1767
    %v1769 = vrot.slane %v1704, %v1768
    %vm1770 = vcmask 326912
    %v1771 = vsel %vm1770, %v1769, %v1764
    %v1772 = vadd.s32 %v1739, 4294967256
    %v1773 = vlaneseq
    %v1774 = vshrl.u32 %v1773, 7
    %v1775 = vsub.s32 %v1772, %v1774
    %v1776 = vrot.slane %v1707, %v1775
    %vm1777 = vcmask 392512
    %v1778 = vsel %vm1777, %v1776, %v1771
    %v1779 = vadd.s32 %v1739, 4294967248
    %v1780 = vlaneseq
    %v1781 = vshrl.u32 %v1780, 7
    %v1782 = vsub.s32 %v1779, %v1781
    %v1783 = vrot.slane %v1710, %v1782
    %vm1784 = vcmask 458112
    %v1785 = vsel %vm1784, %v1783, %v1778
    %v1786 = vadd.s32 %v1739, 4294967240
    %v1787 = vlaneseq
    %v1788 = vshrl.u32 %v1787, 7
    %v1789 = vsub.s32 %v1786, %v1788
    %v1790 = vrot.slane %v1713, %v1789
    %vm1791 = vcmask 523712
    %v1792 = vsel %vm1791, %v1790, %v1785
    %v1793 = vadd.s32 %v1739, 4294967232
    %v1794 = vlaneseq
    %v1795 = vshrl.u32 %v1794, 7
    %v1796 = vsub.s32 %v1793, %v1795
    %v1797 = vrot.slane %v1716, %v1796
    %vm1798 = vcmask 589312
    %v1799 = vsel %vm1798, %v1797, %v1792
    %v1800 = vadd.s32 %v1739, 4294967224
    %v1801 = vlaneseq
    %v1802 = vshrl.u32 %v1801, 7
    %v1803 = vsub.s32 %v1800, %v1802
    %v1804 = vrot.slane %v1719, %v1803
    %vm1805 = vcmask 654912
    %v1806 = vsel %vm1805, %v1804, %v1799
    %v1807 = vadd.s32 %v1739, 4294967216
    %v1808 = vlaneseq
    %v1809 = vshrl.u32 %v1808, 7
    %v1810 = vsub.s32 %v1807, %v1809
    %v1811 = vrot.slane %v1722, %v1810
    %vm1812 = vcmask 720512
    %v1813 = vsel %vm1812, %v1811, %v1806
    %v1814 = vadd.s32 %v1739, 4294967208
    %v1815 = vlaneseq
    %v1816 = vshrl.u32 %v1815, 7
    %v1817 = vsub.s32 %v1814, %v1816
    %v1818 = vrot.slane %v1725, %v1817
    %vm1819 = vcmask 786112
    %v1820 = vsel %vm1819, %v1818, %v1813
    %v1821 = vadd.s32 %v1739, 4294967200
    %v1822 = vlaneseq
    %v1823 = vshrl.u32 %v1822, 7
    %v1824 = vsub.s32 %v1821, %v1823
    %v1825 = vrot.slane %v1728, %v1824
    %vm1826 = vcmask 851712
    %v1827 = vsel %vm1826, %v1825, %v1820
    %v1828 = vadd.s32 %v1739, 4294967192
    %v1829 = vlaneseq
    %v1830 = vshrl.u32 %v1829, 7
    %v1831 = vsub.s32 %v1828, %v1830
    %v1832 = vrot.slane %v1731, %v1831
    %vm1833 = vcmask 917312
    %v1834 = vsel %vm1833, %v1832, %v1827
    %v1835 = vadd.s32 %v1739, 4294967184
    %v1836 = vlaneseq
    %v1837 = vshrl.u32 %v1836, 7
    %v1838 = vsub.s32 %v1835, %v1837
    %v1839 = vrot.slane %v1734, %v1838
    %vm1840 = vcmask 982912
    %v1841 = vsel %vm1840, %v1839, %v1834
    %v1842 = vadd.s32 %v1739, 4294967176
    %v1843 = vlaneseq
    %v1844 = vshrl.u32 %v1843, 7
    %v1845 = vsub.s32 %v1842, %v1844
    %v1846 = vrot.slane %v1737, %v1845
    %vm1847 = vcmask 1048512
    %v1848 = vsel %vm1847, %v1846, %v1841
    %v1850 = vunpack.c.l.s4 1966171168
    %v1851 = vunpack.c.0.s8 %v1850
    %v1852 = vlaneseq
    %v1853 = vshrl.u32 %v1852, 7
    %v1854 = vsub.s32 %v1851, %v1853
    %v1855 = vrot.slane %v1848, %v1854
    %v1857 = vunpack.c.l.s4 1966171168
    %v1858 = vunpack.c.0.s8 %v1857
    %v1859 = vlaneseq
    %v1860 = vshrl.u32 %v1859, 7
    %v1861 = vsub.s32 %v1858, %v1860
    %v1862 = vrot.slane %v1855, %v1861
    %v1864 = vmul.f32 %v217, %v1862
    %v1865 = vsub.f32 1.0, %v217
    %v1882 = vlaneseq
    %v1883 = vshrl.u32 %v1882, 7
    %v1884 = vsub.s32 0, %v1883
    %v1885 = vrot.slane %v362, %v1884
    %v1886 = vlaneseq
    %v1887 = vshrl.u32 %v1886, 7
    %v1888 = vsub.s32 1, %v1887
    %v1889 = vrot.slane %v362, %v1888
    %v1890 = vlaneseq
    %v1891 = vshrl.u32 %v1890, 7
    %v1892 = vsub.s32 2, %v1891
    %v1893 = vrot.slane %v362, %v1892
    %v1894 = vlaneseq
    %v1895 = vshrl.u32 %v1894, 7
    %v1896 = vsub.s32 3, %v1895
    %v1897 = vrot.slane %v362, %v1896
    %v1898 = vlaneseq
    %v1899 = vshrl.u32 %v1898, 7
    %v1900 = vsub.s32 4, %v1899
    %v1901 = vrot.slane %v362, %v1900
    %v1902 = vlaneseq
    %v1903 = vshrl.u32 %v1902, 7
    %v1904 = vsub.s32 5, %v1903
    %v1905 = vrot.slane %v362, %v1904
    %v1906 = vlaneseq
    %v1907 = vshrl.u32 %v1906, 7
    %v1908 = vsub.s32 6, %v1907
    %v1909 = vrot.slane %v362, %v1908
    %v1910 = vlaneseq
    %v1911 = vshrl.u32 %v1910, 7
    %v1912 = vsub.s32 7, %v1911
    %v1913 = vrot.slane %v362, %v1912
    %v1914 = vlaneseq
    %v1915 = vshrl.u32 %v1914, 7
    %v1916 = vsub.s32 0, %v1915
    %v1917 = vrot.slane %v363, %v1916
    %v1918 = vlaneseq
    %v1919 = vshrl.u32 %v1918, 7
    %v1920 = vsub.s32 1, %v1919
    %v1921 = vrot.slane %v363, %v1920
    %v1922 = vlaneseq
    %v1923 = vshrl.u32 %v1922, 7
    %v1924 = vsub.s32 2, %v1923
    %v1925 = vrot.slane %v363, %v1924
    %v1926 = vlaneseq
    %v1927 = vshrl.u32 %v1926, 7
    %v1928 = vsub.s32 3, %v1927
    %v1929 = vrot.slane %v363, %v1928
    %v1930 = vlaneseq
    %v1931 = vshrl.u32 %v1930, 7
    %v1932 = vsub.s32 4, %v1931
    %v1933 = vrot.slane %v363, %v1932
    %v1934 = vlaneseq
    %v1935 = vshrl.u32 %v1934, 7
    %v1936 = vsub.s32 5, %v1935
    %v1937 = vrot.slane %v363, %v1936
    %v1938 = vlaneseq
    %v1939 = vshrl.u32 %v1938, 7
    %v1940 = vsub.s32 6, %v1939
    %v1941 = vrot.slane %v363, %v1940
    %v1942 = vlaneseq
    %v1943 = vshrl.u32 %v1942, 7
    %v1944 = vsub.s32 7, %v1943
    %v1945 = vrot.slane %v363, %v1944
    %v1946 = vlaneseq
    %v1947 = vshrl.u32 %v1946, 7
    %v1948 = vsub.s32 0, %v1947
    %v1949 = vrot.slane %v364, %v1948
    %v1950 = vlaneseq
    %v1951 = vshrl.u32 %v1950, 7
    %v1952 = vsub.s32 1, %v1951
    %v1953 = vrot.slane %v364, %v1952
    %v1954 = vlaneseq
    %v1955 = vshrl.u32 %v1954, 7
    %v1956 = vsub.s32 2, %v1955
    %v1957 = vrot.slane %v364, %v1956
    %v1958 = vlaneseq
    %v1959 = vshrl.u32 %v1958, 7
    %v1960 = vsub.s32 3, %v1959
    %v1961 = vrot.slane %v364, %v1960
    %v1962 = vlaneseq
    %v1963 = vshrl.u32 %v1962, 7
    %v1964 = vsub.s32 4, %v1963
    %v1965 = vrot.slane %v364, %v1964
    %v1966 = vlaneseq
    %v1967 = vshrl.u32 %v1966, 7
    %v1968 = vsub.s32 5, %v1967
    %v1969 = vrot.slane %v364, %v1968
    %v1970 = vlaneseq
    %v1971 = vshrl.u32 %v1970, 7
    %v1972 = vsub.s32 6, %v1971
    %v1973 = vrot.slane %v364, %v1972
    %v1974 = vlaneseq
    %v1975 = vshrl.u32 %v1974, 7
    %v1976 = vsub.s32 7, %v1975
    %v1977 = vrot.slane %v364, %v1976
    %v1978 = vlaneseq
    %v1979 = vshrl.u32 %v1978, 7
    %v1980 = vsub.s32 0, %v1979
    %v1981 = vrot.slane %v365, %v1980
    %v1982 = vlaneseq
    %v1983 = vshrl.u32 %v1982, 7
    %v1984 = vsub.s32 1, %v1983
    %v1985 = vrot.slane %v365, %v1984
    %v1986 = vlaneseq
    %v1987 = vshrl.u32 %v1986, 7
    %v1988 = vsub.s32 2, %v1987
    %v1989 = vrot.slane %v365, %v1988
    %v1990 = vlaneseq
    %v1991 = vshrl.u32 %v1990, 7
    %v1992 = vsub.s32 3, %v1991
    %v1993 = vrot.slane %v365, %v1992
    %v1994 = vlaneseq
    %v1995 = vshrl.u32 %v1994, 7
    %v1996 = vsub.s32 4, %v1995
    %v1997 = vrot.slane %v365, %v1996
    %v1998 = vlaneseq
    %v1999 = vshrl.u32 %v1998, 7
    %v2000 = vsub.s32 5, %v1999
    %v2001 = vrot.slane %v365, %v2000
    %v2002 = vlaneseq
    %v2003 = vshrl.u32 %v2002, 7
    %v2004 = vsub.s32 6, %v2003
    %v2005 = vrot.slane %v365, %v2004
    %v2006 = vlaneseq
    %v2007 = vshrl.u32 %v2006, 7
    %v2008 = vsub.s32 7, %v2007
    %v2009 = vrot.slane %v365, %v2008
    %v2010 = vlaneseq
    %v2011 = vshrl.u32 %v2010, 7
    %v2012 = vsub.s32 0, %v2011
    %v2013 = vrot.slane %v366, %v2012
    %v2014 = vlaneseq
    %v2015 = vshrl.u32 %v2014, 7
    %v2016 = vsub.s32 1, %v2015
    %v2017 = vrot.slane %v366, %v2016
    %v2018 = vlaneseq
    %v2019 = vshrl.u32 %v2018, 7
    %v2020 = vsub.s32 2, %v2019
    %v2021 = vrot.slane %v366, %v2020
    %v2022 = vlaneseq
    %v2023 = vshrl.u32 %v2022, 7
    %v2024 = vsub.s32 3, %v2023
    %v2025 = vrot.slane %v366, %v2024
    %v2026 = vlaneseq
    %v2027 = vshrl.u32 %v2026, 7
    %v2028 = vsub.s32 4, %v2027
    %v2029 = vrot.slane %v366, %v2028
    %v2030 = vlaneseq
    %v2031 = vshrl.u32 %v2030, 7
    %v2032 = vsub.s32 5, %v2031
    %v2033 = vrot.slane %v366, %v2032
    %v2034 = vlaneseq
    %v2035 = vshrl.u32 %v2034, 7
    %v2036 = vsub.s32 6, %v2035
    %v2037 = vrot.slane %v366, %v2036
    %v2038 = vlaneseq
    %v2039 = vshrl.u32 %v2038, 7
    %v2040 = vsub.s32 7, %v2039
    %v2041 = vrot.slane %v366, %v2040
    %v2042 = vlaneseq
    %v2043 = vshrl.u32 %v2042, 7
    %v2044 = vsub.s32 0, %v2043
    %v2045 = vrot.slane %v367, %v2044
    %v2046 = vlaneseq
    %v2047 = vshrl.u32 %v2046, 7
    %v2048 = vsub.s32 1, %v2047
    %v2049 = vrot.slane %v367, %v2048
    %v2050 = vlaneseq
    %v2051 = vshrl.u32 %v2050, 7
    %v2052 = vsub.s32 2, %v2051
    %v2053 = vrot.slane %v367, %v2052
    %v2054 = vlaneseq
    %v2055 = vshrl.u32 %v2054, 7
    %v2056 = vsub.s32 3, %v2055
    %v2057 = vrot.slane %v367, %v2056
    %v2058 = vlaneseq
    %v2059 = vshrl.u32 %v2058, 7
    %v2060 = vsub.s32 4, %v2059
    %v2061 = vrot.slane %v367, %v2060
    %v2062 = vlaneseq
    %v2063 = vshrl.u32 %v2062, 7
    %v2064 = vsub.s32 5, %v2063
    %v2065 = vrot.slane %v367, %v2064
    %v2066 = vlaneseq
    %v2067 = vshrl.u32 %v2066, 7
    %v2068 = vsub.s32 6, %v2067
    %v2069 = vrot.slane %v367, %v2068
    %v2070 = vlaneseq
    %v2071 = vshrl.u32 %v2070, 7
    %v2072 = vsub.s32 7, %v2071
    %v2073 = vrot.slane %v367, %v2072
    %v2074 = vlaneseq
    %v2075 = vshrl.u32 %v2074, 7
    %v2076 = vsub.s32 0, %v2075
    %v2077 = vrot.slane %v368, %v2076
    %v2078 = vlaneseq
    %v2079 = vshrl.u32 %v2078, 7
    %v2080 = vsub.s32 1, %v2079
    %v2081 = vrot.slane %v368, %v2080
    %v2082 = vlaneseq
    %v2083 = vshrl.u32 %v2082, 7
    %v2084 = vsub.s32 2, %v2083
    %v2085 = vrot.slane %v368, %v2084
    %v2086 = vlaneseq
    %v2087 = vshrl.u32 %v2086, 7
    %v2088 = vsub.s32 3, %v2087
    %v2089 = vrot.slane %v368, %v2088
    %v2090 = vlaneseq
    %v2091 = vshrl.u32 %v2090, 7
    %v2092 = vsub.s32 4, %v2091
    %v2093 = vrot.slane %v368, %v2092
    %v2094 = vlaneseq
    %v2095 = vshrl.u32 %v2094, 7
    %v2096 = vsub.s32 5, %v2095
    %v2097 = vrot.slane %v368, %v2096
    %v2098 = vlaneseq
    %v2099 = vshrl.u32 %v2098, 7
    %v2100 = vsub.s32 6, %v2099
    %v2101 = vrot.slane %v368, %v2100
    %v2102 = vlaneseq
    %v2103 = vshrl.u32 %v2102, 7
    %v2104 = vsub.s32 7, %v2103
    %v2105 = vrot.slane %v368, %v2104
    %v2106 = vlaneseq
    %v2107 = vshrl.u32 %v2106, 7
    %v2108 = vsub.s32 0, %v2107
    %v2109 = vrot.slane %v369, %v2108
    %v2110 = vlaneseq
    %v2111 = vshrl.u32 %v2110, 7
    %v2112 = vsub.s32 1, %v2111
    %v2113 = vrot.slane %v369, %v2112
    %v2114 = vlaneseq
    %v2115 = vshrl.u32 %v2114, 7
    %v2116 = vsub.s32 2, %v2115
    %v2117 = vrot.slane %v369, %v2116
    %v2118 = vlaneseq
    %v2119 = vshrl.u32 %v2118, 7
    %v2120 = vsub.s32 3, %v2119
    %v2121 = vrot.slane %v369, %v2120
    %v2122 = vlaneseq
    %v2123 = vshrl.u32 %v2122, 7
    %v2124 = vsub.s32 4, %v2123
    %v2125 = vrot.slane %v369, %v2124
    %v2126 = vlaneseq
    %v2127 = vshrl.u32 %v2126, 7
    %v2128 = vsub.s32 5, %v2127
    %v2129 = vrot.slane %v369, %v2128
    %v2130 = vlaneseq
    %v2131 = vshrl.u32 %v2130, 7
    %v2132 = vsub.s32 6, %v2131
    %v2133 = vrot.slane %v369, %v2132
    %v2134 = vlaneseq
    %v2135 = vshrl.u32 %v2134, 7
    %v2136 = vsub.s32 7, %v2135
    %v2137 = vrot.slane %v369, %v2136
    %v2138 = vlaneseq
    %v2139 = vshrl.u32 %v2138, 7
    %v2140 = vsub.s32 0, %v2139
    %v2141 = vrot.slane %v370, %v2140
    %v2142 = vlaneseq
    %v2143 = vshrl.u32 %v2142, 7
    %v2144 = vsub.s32 1, %v2143
    %v2145 = vrot.slane %v370, %v2144
    %v2146 = vlaneseq
    %v2147 = vshrl.u32 %v2146, 7
    %v2148 = vsub.s32 2, %v2147
    %v2149 = vrot.slane %v370, %v2148
    %v2150 = vlaneseq
    %v2151 = vshrl.u32 %v2150, 7
    %v2152 = vsub.s32 3, %v2151
    %v2153 = vrot.slane %v370, %v2152
    %v2154 = vlaneseq
    %v2155 = vshrl.u32 %v2154, 7
    %v2156 = vsub.s32 4, %v2155
    %v2157 = vrot.slane %v370, %v2156
    %v2158 = vlaneseq
    %v2159 = vshrl.u32 %v2158, 7
    %v2160 = vsub.s32 5, %v2159
    %v2161 = vrot.slane %v370, %v2160
    %v2162 = vlaneseq
    %v2163 = vshrl.u32 %v2162, 7
    %v2164 = vsub.s32 6, %v2163
    %v2165 = vrot.slane %v370, %v2164
    %v2166 = vlaneseq
    %v2167 = vshrl.u32 %v2166, 7
    %v2168 = vsub.s32 7, %v2167
    %v2169 = vrot.slane %v370, %v2168
    %v2170 = vlaneseq
    %v2171 = vshrl.u32 %v2170, 7
    %v2172 = vsub.s32 0, %v2171
    %v2173 = vrot.slane %v371, %v2172
    %v2174 = vlaneseq
    %v2175 = vshrl.u32 %v2174, 7
    %v2176 = vsub.s32 1, %v2175
    %v2177 = vrot.slane %v371, %v2176
    %v2178 = vlaneseq
    %v2179 = vshrl.u32 %v2178, 7
    %v2180 = vsub.s32 2, %v2179
    %v2181 = vrot.slane %v371, %v2180
    %v2182 = vlaneseq
    %v2183 = vshrl.u32 %v2182, 7
    %v2184 = vsub.s32 3, %v2183
    %v2185 = vrot.slane %v371, %v2184
    %v2186 = vlaneseq
    %v2187 = vshrl.u32 %v2186, 7
    %v2188 = vsub.s32 4, %v2187
    %v2189 = vrot.slane %v371, %v2188
    %v2190 = vlaneseq
    %v2191 = vshrl.u32 %v2190, 7
    %v2192 = vsub.s32 5, %v2191
    %v2193 = vrot.slane %v371, %v2192
    %v2194 = vlaneseq
    %v2195 = vshrl.u32 %v2194, 7
    %v2196 = vsub.s32 6, %v2195
    %v2197 = vrot.slane %v371, %v2196
    %v2198 = vlaneseq
    %v2199 = vshrl.u32 %v2198, 7
    %v2200 = vsub.s32 7, %v2199
    %v2201 = vrot.slane %v371, %v2200
    %v2202 = vlaneseq
    %v2203 = vshrl.u32 %v2202, 7
    %v2204 = vsub.s32 0, %v2203
    %v2205 = vrot.slane %v372, %v2204
    %v2206 = vlaneseq
    %v2207 = vshrl.u32 %v2206, 7
    %v2208 = vsub.s32 1, %v2207
    %v2209 = vrot.slane %v372, %v2208
    %v2210 = vlaneseq
    %v2211 = vshrl.u32 %v2210, 7
    %v2212 = vsub.s32 2, %v2211
    %v2213 = vrot.slane %v372, %v2212
    %v2214 = vlaneseq
    %v2215 = vshrl.u32 %v2214, 7
    %v2216 = vsub.s32 3, %v2215
    %v2217 = vrot.slane %v372, %v2216
    %v2218 = vlaneseq
    %v2219 = vshrl.u32 %v2218, 7
    %v2220 = vsub.s32 4, %v2219
    %v2221 = vrot.slane %v372, %v2220
    %v2222 = vlaneseq
    %v2223 = vshrl.u32 %v2222, 7
    %v2224 = vsub.s32 5, %v2223
    %v2225 = vrot.slane %v372, %v2224
    %v2226 = vlaneseq
    %v2227 = vshrl.u32 %v2226, 7
    %v2228 = vsub.s32 6, %v2227
    %v2229 = vrot.slane %v372, %v2228
    %v2230 = vlaneseq
    %v2231 = vshrl.u32 %v2230, 7
    %v2232 = vsub.s32 7, %v2231
    %v2233 = vrot.slane %v372, %v2232
    %v2234 = vlaneseq
    %v2235 = vshrl.u32 %v2234, 7
    %v2236 = vsub.s32 0, %v2235
    %v2237 = vrot.slane %v373, %v2236
    %v2238 = vlaneseq
    %v2239 = vshrl.u32 %v2238, 7
    %v2240 = vsub.s32 1, %v2239
    %v2241 = vrot.slane %v373, %v2240
    %v2242 = vlaneseq
    %v2243 = vshrl.u32 %v2242, 7
    %v2244 = vsub.s32 2, %v2243
    %v2245 = vrot.slane %v373, %v2244
    %v2246 = vlaneseq
    %v2247 = vshrl.u32 %v2246, 7
    %v2248 = vsub.s32 3, %v2247
    %v2249 = vrot.slane %v373, %v2248
    %v2250 = vlaneseq
    %v2251 = vshrl.u32 %v2250, 7
    %v2252 = vsub.s32 4, %v2251
    %v2253 = vrot.slane %v373, %v2252
    %v2254 = vlaneseq
    %v2255 = vshrl.u32 %v2254, 7
    %v2256 = vsub.s32 5, %v2255
    %v2257 = vrot.slane %v373, %v2256
    %v2258 = vlaneseq
    %v2259 = vshrl.u32 %v2258, 7
    %v2260 = vsub.s32 6, %v2259
    %v2261 = vrot.slane %v373, %v2260
    %v2262 = vlaneseq
    %v2263 = vshrl.u32 %v2262, 7
    %v2264 = vsub.s32 7, %v2263
    %v2265 = vrot.slane %v373, %v2264
    %v2266 = vlaneseq
    %v2267 = vshrl.u32 %v2266, 7
    %v2268 = vsub.s32 0, %v2267
    %v2269 = vrot.slane %v374, %v2268
    %v2270 = vlaneseq
    %v2271 = vshrl.u32 %v2270, 7
    %v2272 = vsub.s32 1, %v2271
    %v2273 = vrot.slane %v374, %v2272
    %v2274 = vlaneseq
    %v2275 = vshrl.u32 %v2274, 7
    %v2276 = vsub.s32 2, %v2275
    %v2277 = vrot.slane %v374, %v2276
    %v2278 = vlaneseq
    %v2279 = vshrl.u32 %v2278, 7
    %v2280 = vsub.s32 3, %v2279
    %v2281 = vrot.slane %v374, %v2280
    %v2282 = vlaneseq
    %v2283 = vshrl.u32 %v2282, 7
    %v2284 = vsub.s32 4, %v2283
    %v2285 = vrot.slane %v374, %v2284
    %v2286 = vlaneseq
    %v2287 = vshrl.u32 %v2286, 7
    %v2288 = vsub.s32 5, %v2287
    %v2289 = vrot.slane %v374, %v2288
    %v2290 = vlaneseq
    %v2291 = vshrl.u32 %v2290, 7
    %v2292 = vsub.s32 6, %v2291
    %v2293 = vrot.slane %v374, %v2292
    %v2294 = vlaneseq
    %v2295 = vshrl.u32 %v2294, 7
    %v2296 = vsub.s32 7, %v2295
    %v2297 = vrot.slane %v374, %v2296
    %v2298 = vlaneseq
    %v2299 = vshrl.u32 %v2298, 7
    %v2300 = vsub.s32 0, %v2299
    %v2301 = vrot.slane %v375, %v2300
    %v2302 = vlaneseq
    %v2303 = vshrl.u32 %v2302, 7
    %v2304 = vsub.s32 1, %v2303
    %v2305 = vrot.slane %v375, %v2304
    %v2306 = vlaneseq
    %v2307 = vshrl.u32 %v2306, 7
    %v2308 = vsub.s32 2, %v2307
    %v2309 = vrot.slane %v375, %v2308
    %v2310 = vlaneseq
    %v2311 = vshrl.u32 %v2310, 7
    %v2312 = vsub.s32 3, %v2311
    %v2313 = vrot.slane %v375, %v2312
    %v2314 = vlaneseq
    %v2315 = vshrl.u32 %v2314, 7
    %v2316 = vsub.s32 4, %v2315
    %v2317 = vrot.slane %v375, %v2316
    %v2318 = vlaneseq
    %v2319 = vshrl.u32 %v2318, 7
    %v2320 = vsub.s32 5, %v2319
    %v2321 = vrot.slane %v375, %v2320
    %v2322 = vlaneseq
    %v2323 = vshrl.u32 %v2322, 7
    %v2324 = vsub.s32 6, %v2323
    %v2325 = vrot.slane %v375, %v2324
    %v2326 = vlaneseq
    %v2327 = vshrl.u32 %v2326, 7
    %v2328 = vsub.s32 7, %v2327
    %v2329 = vrot.slane %v375, %v2328
    %v2330 = vlaneseq
    %v2331 = vshrl.u32 %v2330, 7
    %v2332 = vsub.s32 0, %v2331
    %v2333 = vrot.slane %v376, %v2332
    %v2334 = vlaneseq
    %v2335 = vshrl.u32 %v2334, 7
    %v2336 = vsub.s32 1, %v2335
    %v2337 = vrot.slane %v376, %v2336
    %v2338 = vlaneseq
    %v2339 = vshrl.u32 %v2338, 7
    %v2340 = vsub.s32 2, %v2339
    %v2341 = vrot.slane %v376, %v2340
    %v2342 = vlaneseq
    %v2343 = vshrl.u32 %v2342, 7
    %v2344 = vsub.s32 3, %v2343
    %v2345 = vrot.slane %v376, %v2344
    %v2346 = vlaneseq
    %v2347 = vshrl.u32 %v2346, 7
    %v2348 = vsub.s32 4, %v2347
    %v2349 = vrot.slane %v376, %v2348
    %v2350 = vlaneseq
    %v2351 = vshrl.u32 %v2350, 7
    %v2352 = vsub.s32 5, %v2351
    %v2353 = vrot.slane %v376, %v2352
    %v2354 = vlaneseq
    %v2355 = vshrl.u32 %v2354, 7
    %v2356 = vsub.s32 6, %v2355
    %v2357 = vrot.slane %v376, %v2356
    %v2358 = vlaneseq
    %v2359 = vshrl.u32 %v2358, 7
    %v2360 = vsub.s32 7, %v2359
    %v2361 = vrot.slane %v376, %v2360
    %v2362 = vlaneseq
    %v2363 = vshrl.u32 %v2362, 7
    %v2364 = vsub.s32 0, %v2363
    %v2365 = vrot.slane %v377, %v2364
    %v2366 = vlaneseq
    %v2367 = vshrl.u32 %v2366, 7
    %v2368 = vsub.s32 1, %v2367
    %v2369 = vrot.slane %v377, %v2368
    %v2370 = vlaneseq
    %v2371 = vshrl.u32 %v2370, 7
    %v2372 = vsub.s32 2, %v2371
    %v2373 = vrot.slane %v377, %v2372
    %v2374 = vlaneseq
    %v2375 = vshrl.u32 %v2374, 7
    %v2376 = vsub.s32 3, %v2375
    %v2377 = vrot.slane %v377, %v2376
    %v2378 = vlaneseq
    %v2379 = vshrl.u32 %v2378, 7
    %v2380 = vsub.s32 4, %v2379
    %v2381 = vrot.slane %v377, %v2380
    %v2382 = vlaneseq
    %v2383 = vshrl.u32 %v2382, 7
    %v2384 = vsub.s32 5, %v2383
    %v2385 = vrot.slane %v377, %v2384
    %v2386 = vlaneseq
    %v2387 = vshrl.u32 %v2386, 7
    %v2388 = vsub.s32 6, %v2387
    %v2389 = vrot.slane %v377, %v2388
    %v2390 = vlaneseq
    %v2391 = vshrl.u32 %v2390, 7
    %v2392 = vsub.s32 7, %v2391
    %v2393 = vrot.slane %v377, %v2392
    %v2394 = vcombine.low %v1885, %v1889
    %v2395 = vcombine.low %v1893, %v1897
    %v2396 = vcombine.low %v1901, %v1905
    %v2397 = vcombine.low %v1909, %v1913
    %v2399 = vunpack.c.l.s4 1966171168
    %v2400 = vunpack.c.0.s8 %v2399
    %v2401 = vlaneseq
    %v2402 = vshrl.u32 %v2401, 7
    %v2403 = vsub.s32 %v2400, %v2402
    %v2404 = vrot.slane %v2394, %v2403
    %v2406 = vunpack.c.l.s4 1966171168
    %v2407 = vunpack.c.0.s8 %v2406
    %v2408 = vlaneseq
    %v2409 = vshrl.u32 %v2408, 7
    %v2410 = vsub.s32 %v2407, %v2409
    %v2411 = vrot.slane %v2395, %v2410
    %v2413 = vunpack.c.l.s4 1966171168
    %v2414 = vunpack.c.0.s8 %v2413
    %v2415 = vlaneseq
    %v2416 = vshrl.u32 %v2415, 7
    %v2417 = vsub.s32 %v2414, %v2416
    %v2418 = vrot.slane %v2396, %v2417
    %v2420 = vunpack.c.l.s4 1966171168
    %v2421 = vunpack.c.0.s8 %v2420
    %v2422 = vlaneseq
    %v2423 = vshrl.u32 %v2422, 7
    %v2424 = vsub.s32 %v2421, %v2423
    %v2425 = vrot.slane %v2397, %v2424
    %v2426 = vcombine.low %v2404, %v2411
    %v2427 = vcombine.low %v2418, %v2425
    %v2429 = vunpack.c.l.s4 1966171168
    %v2430 = vunpack.c.0.s8 %v2429
    %v2431 = vlaneseq
    %v2432 = vshrl.u32 %v2431, 7
    %v2433 = vsub.s32 %v2430, %v2432
    %v2434 = vrot.slane %v2426, %v2433
    %v2436 = vunpack.c.l.s4 1966171168
    %v2437 = vunpack.c.0.s8 %v2436
    %v2438 = vlaneseq
    %v2439 = vshrl.u32 %v2438, 7
    %v2440 = vsub.s32 %v2437, %v2439
    %v2441 = vrot.slane %v2427, %v2440
    %v2442 = vcombine.low %v2434, %v2441
    %v2443 = vcombine.low %v1917, %v1921
    %v2444 = vcombine.low %v1925, %v1929
    %v2445 = vcombine.low %v1933, %v1937
    %v2446 = vcombine.low %v1941, %v1945
    %v2448 = vunpack.c.l.s4 1966171168
    %v2449 = vunpack.c.0.s8 %v2448
    %v2450 = vlaneseq
    %v2451 = vshrl.u32 %v2450, 7
    %v2452 = vsub.s32 %v2449, %v2451
    %v2453 = vrot.slane %v2443, %v2452
    %v2455 = vunpack.c.l.s4 1966171168
    %v2456 = vunpack.c.0.s8 %v2455
    %v2457 = vlaneseq
    %v2458 = vshrl.u32 %v2457, 7
    %v2459 = vsub.s32 %v2456, %v2458
    %v2460 = vrot.slane %v2444, %v2459
    %v2462 = vunpack.c.l.s4 1966171168
    %v2463 = vunpack.c.0.s8 %v2462
    %v2464 = vlaneseq
    %v2465 = vshrl.u32 %v2464, 7
    %v2466 = vsub.s32 %v2463, %v2465
    %v2467 = vrot.slane %v2445, %v2466
    %v2469 = vunpack.c.l.s4 1966171168
    %v2470 = vunpack.c.0.s8 %v2469
    %v2471 = vlaneseq
    %v2472 = vshrl.u32 %v2471, 7
    %v2473 = vsub.s32 %v2470, %v2472
    %v2474 = vrot.slane %v2446, %v2473
    %v2475 = vcombine.low %v2453, %v2460
    %v2476 = vcombine.low %v2467, %v2474
    %v2478 = vunpack.c.l.s4 1966171168
    %v2479 = vunpack.c.0.s8 %v2478
    %v2480 = vlaneseq
    %v2481 = vshrl.u32 %v2480, 7
    %v2482 = vsub.s32 %v2479, %v2481
    %v2483 = vrot.slane %v2475, %v2482
    %v2485 = vunpack.c.l.s4 1966171168
    %v2486 = vunpack.c.0.s8 %v2485
    %v2487 = vlaneseq
    %v2488 = vshrl.u32 %v2487, 7
    %v2489 = vsub.s32 %v2486, %v2488
    %v2490 = vrot.slane %v2476, %v2489
    %v2491 = vcombine.low %v2483, %v2490
    %v2492 = vcombine.low %v1949, %v1953
    %v2493 = vcombine.low %v1957, %v1961
    %v2494 = vcombine.low %v1965, %v1969
    %v2495 = vcombine.low %v1973, %v1977
    %v2497 = vunpack.c.l.s4 1966171168
    %v2498 = vunpack.c.0.s8 %v2497
    %v2499 = vlaneseq
    %v2500 = vshrl.u32 %v2499, 7
    %v2501 = vsub.s32 %v2498, %v2500
    %v2502 = vrot.slane %v2492, %v2501
    %v2504 = vunpack.c.l.s4 1966171168
    %v2505 = vunpack.c.0.s8 %v2504
    %v2506 = vlaneseq
    %v2507 = vshrl.u32 %v2506, 7
    %v2508 = vsub.s32 %v2505, %v2507
    %v2509 = vrot.slane %v2493, %v2508
    %v2511 = vunpack.c.l.s4 1966171168
    %v2512 = vunpack.c.0.s8 %v2511
    %v2513 = vlaneseq
    %v2514 = vshrl.u32 %v2513, 7
    %v2515 = vsub.s32 %v2512, %v2514
    %v2516 = vrot.slane %v2494, %v2515
    %v2518 = vunpack.c.l.s4 1966171168
    %v2519 = vunpack.c.0.s8 %v2518
    %v2520 = vlaneseq
    %v2521 = vshrl.u32 %v2520, 7
    %v2522 = vsub.s32 %v2519, %v2521
    %v2523 = vrot.slane %v2495, %v2522
    %v2524 = vcombine.low %v2502, %v2509
    %v2525 = vcombine.low %v2516, %v2523
    %v2527 = vunpack.c.l.s4 1966171168
    %v2528 = vunpack.c.0.s8 %v2527
    %v2529 = vlaneseq
    %v2530 = vshrl.u32 %v2529, 7
    %v2531 = vsub.s32 %v2528, %v2530
    %v2532 = vrot.slane %v2524, %v2531
    %v2534 = vunpack.c.l.s4 1966171168
    %v2535 = vunpack.c.0.s8 %v2534
    %v2536 = vlaneseq
    %v2537 = vshrl.u32 %v2536, 7
    %v2538 = vsub.s32 %v2535, %v2537
    %v2539 = vrot.slane %v2525, %v2538
    %v2540 = vcombine.low %v2532, %v2539
    %v2541 = vcombine.low %v1981, %v1985
    %v2542 = vcombine.low %v1989, %v1993
    %v2543 = vcombine.low %v1997, %v2001
    %v2544 = vcombine.low %v2005, %v2009
    %v2546 = vunpack.c.l.s4 1966171168
    %v2547 = vunpack.c.0.s8 %v2546
    %v2548 = vlaneseq
    %v2549 = vshrl.u32 %v2548, 7
    %v2550 = vsub.s32 %v2547, %v2549
    %v2551 = vrot.slane %v2541, %v2550
    %v2553 = vunpack.c.l.s4 1966171168
    %v2554 = vunpack.c.0.s8 %v2553
    %v2555 = vlaneseq
    %v2556 = vshrl.u32 %v2555, 7
    %v2557 = vsub.s32 %v2554, %v2556
    %v2558 = vrot.slane %v2542, %v2557
    %v2560 = vunpack.c.l.s4 1966171168
    %v2561 = vunpack.c.0.s8 %v2560
    %v2562 = vlaneseq
    %v2563 = vshrl.u32 %v2562, 7
    %v2564 = vsub.s32 %v2561, %v2563
    %v2565 = vrot.slane %v2543, %v2564
    %v2567 = vunpack.c.l.s4 1966171168
    %v2568 = vunpack.c.0.s8 %v2567
    %v2569 = vlaneseq
    %v2570 = vshrl.u32 %v2569, 7
    %v2571 = vsub.s32 %v2568, %v2570
    %v2572 = vrot.slane %v2544, %v2571
    %v2573 = vcombine.low %v2551, %v2558
    %v2574 = vcombine.low %v2565, %v2572
    %v2576 = vunpack.c.l.s4 1966171168
    %v2577 = vunpack.c.0.s8 %v2576
    %v2578 = vlaneseq
    %v2579 = vshrl.u32 %v2578, 7
    %v2580 = vsub.s32 %v2577, %v2579
    %v2581 = vrot.slane %v2573, %v2580
    %v2583 = vunpack.c.l.s4 1966171168
    %v2584 = vunpack.c.0.s8 %v2583
    %v2585 = vlaneseq
    %v2586 = vshrl.u32 %v2585, 7
    %v2587 = vsub.s32 %v2584, %v2586
    %v2588 = vrot.slane %v2574, %v2587
    %v2589 = vcombine.low %v2581, %v2588
    %v2590 = vcombine.low %v2013, %v2017
    %v2591 = vcombine.low %v2021, %v2025
    %v2592 = vcombine.low %v2029, %v2033
    %v2593 = vcombine.low %v2037, %v2041
    %v2595 = vunpack.c.l.s4 1966171168
    %v2596 = vunpack.c.0.s8 %v2595
    %v2597 = vlaneseq
    %v2598 = vshrl.u32 %v2597, 7
    %v2599 = vsub.s32 %v2596, %v2598
    %v2600 = vrot.slane %v2590, %v2599
    %v2602 = vunpack.c.l.s4 1966171168
    %v2603 = vunpack.c.0.s8 %v2602
    %v2604 = vlaneseq
    %v2605 = vshrl.u32 %v2604, 7
    %v2606 = vsub.s32 %v2603, %v2605
    %v2607 = vrot.slane %v2591, %v2606
    %v2609 = vunpack.c.l.s4 1966171168
    %v2610 = vunpack.c.0.s8 %v2609
    %v2611 = vlaneseq
    %v2612 = vshrl.u32 %v2611, 7
    %v2613 = vsub.s32 %v2610, %v2612
    %v2614 = vrot.slane %v2592, %v2613
    %v2616 = vunpack.c.l.s4 1966171168
    %v2617 = vunpack.c.0.s8 %v2616
    %v2618 = vlaneseq
    %v2619 = vshrl.u32 %v2618, 7
    %v2620 = vsub.s32 %v2617, %v2619
    %v2621 = vrot.slane %v2593, %v2620
    %v2622 = vcombine.low %v2600, %v2607
    %v2623 = vcombine.low %v2614, %v2621
    %v2625 = vunpack.c.l.s4 1966171168
    %v2626 = vunpack.c.0.s8 %v2625
    %v2627 = vlaneseq
    %v2628 = vshrl.u32 %v2627, 7
    %v2629 = vsub.s32 %v2626, %v2628
    %v2630 = vrot.slane %v2622, %v2629
    %v2632 = vunpack.c.l.s4 1966171168
    %v2633 = vunpack.c.0.s8 %v2632
    %v2634 = vlaneseq
    %v2635 = vshrl.u32 %v2634, 7
    %v2636 = vsub.s32 %v2633, %v2635
    %v2637 = vrot.slane %v2623, %v2636
    %v2638 = vcombine.low %v2630, %v2637
    %v2639 = vcombine.low %v2045, %v2049
    %v2640 = vcombine.low %v2053, %v2057
    %v2641 = vcombine.low %v2061, %v2065
    %v2642 = vcombine.low %v2069, %v2073
    %v2644 = vunpack.c.l.s4 1966171168
    %v2645 = vunpack.c.0.s8 %v2644
    %v2646 = vlaneseq
    %v2647 = vshrl.u32 %v2646, 7
    %v2648 = vsub.s32 %v2645, %v2647
    %v2649 = vrot.slane %v2639, %v2648
    %v2651 = vunpack.c.l.s4 1966171168
    %v2652 = vunpack.c.0.s8 %v2651
    %v2653 = vlaneseq
    %v2654 = vshrl.u32 %v2653, 7
    %v2655 = vsub.s32 %v2652, %v2654
    %v2656 = vrot.slane %v2640, %v2655
    %v2658 = vunpack.c.l.s4 1966171168
    %v2659 = vunpack.c.0.s8 %v2658
    %v2660 = vlaneseq
    %v2661 = vshrl.u32 %v2660, 7
    %v2662 = vsub.s32 %v2659, %v2661
    %v2663 = vrot.slane %v2641, %v2662
    %v2665 = vunpack.c.l.s4 1966171168
    %v2666 = vunpack.c.0.s8 %v2665
    %v2667 = vlaneseq
    %v2668 = vshrl.u32 %v2667, 7
    %v2669 = vsub.s32 %v2666, %v2668
    %v2670 = vrot.slane %v2642, %v2669
    %v2671 = vcombine.low %v2649, %v2656
    %v2672 = vcombine.low %v2663, %v2670
    %v2674 = vunpack.c.l.s4 1966171168
    %v2675 = vunpack.c.0.s8 %v2674
    %v2676 = vlaneseq
    %v2677 = vshrl.u32 %v2676, 7
    %v2678 = vsub.s32 %v2675, %v2677
    %v2679 = vrot.slane %v2671, %v2678
    %v2681 = vunpack.c.l.s4 1966171168
    %v2682 = vunpack.c.0.s8 %v2681
    %v2683 = vlaneseq
    %v2684 = vshrl.u32 %v2683, 7
    %v2685 = vsub.s32 %v2682, %v2684
    %v2686 = vrot.slane %v2672, %v2685
    %v2687 = vcombine.low %v2679, %v2686
    %v2688 = vcombine.low %v2077, %v2081
    %v2689 = vcombine.low %v2085, %v2089
    %v2690 = vcombine.low %v2093, %v2097
    %v2691 = vcombine.low %v2101, %v2105
    %v2693 = vunpack.c.l.s4 1966171168
    %v2694 = vunpack.c.0.s8 %v2693
    %v2695 = vlaneseq
    %v2696 = vshrl.u32 %v2695, 7
    %v2697 = vsub.s32 %v2694, %v2696
    %v2698 = vrot.slane %v2688, %v2697
    %v2700 = vunpack.c.l.s4 1966171168
    %v2701 = vunpack.c.0.s8 %v2700
    %v2702 = vlaneseq
    %v2703 = vshrl.u32 %v2702, 7
    %v2704 = vsub.s32 %v2701, %v2703
    %v2705 = vrot.slane %v2689, %v2704
    %v2707 = vunpack.c.l.s4 1966171168
    %v2708 = vunpack.c.0.s8 %v2707
    %v2709 = vlaneseq
    %v2710 = vshrl.u32 %v2709, 7
    %v2711 = vsub.s32 %v2708, %v2710
    %v2712 = vrot.slane %v2690, %v2711
    %v2714 = vunpack.c.l.s4 1966171168
    %v2715 = vunpack.c.0.s8 %v2714
    %v2716 = vlaneseq
    %v2717 = vshrl.u32 %v2716, 7
    %v2718 = vsub.s32 %v2715, %v2717
    %v2719 = vrot.slane %v2691, %v2718
    %v2720 = vcombine.low %v2698, %v2705
    %v2721 = vcombine.low %v2712, %v2719
    %v2723 = vunpack.c.l.s4 1966171168
    %v2724 = vunpack.c.0.s8 %v2723
    %v2725 = vlaneseq
    %v2726 = vshrl.u32 %v2725, 7
    %v2727 = vsub.s32 %v2724, %v2726
    %v2728 = vrot.slane %v2720, %v2727
    %v2730 = vunpack.c.l.s4 1966171168
    %v2731 = vunpack.c.0.s8 %v2730
    %v2732 = vlaneseq
    %v2733 = vshrl.u32 %v2732, 7
    %v2734 = vsub.s32 %v2731, %v2733
    %v2735 = vrot.slane %v2721, %v2734
    %v2736 = vcombine.low %v2728, %v2735
    %v2737 = vcombine.low %v2109, %v2113
    %v2738 = vcombine.low %v2117, %v2121
    %v2739 = vcombine.low %v2125, %v2129
    %v2740 = vcombine.low %v2133, %v2137
    %v2742 = vunpack.c.l.s4 1966171168
    %v2743 = vunpack.c.0.s8 %v2742
    %v2744 = vlaneseq
    %v2745 = vshrl.u32 %v2744, 7
    %v2746 = vsub.s32 %v2743, %v2745
    %v2747 = vrot.slane %v2737, %v2746
    %v2749 = vunpack.c.l.s4 1966171168
    %v2750 = vunpack.c.0.s8 %v2749
    %v2751 = vlaneseq
    %v2752 = vshrl.u32 %v2751, 7
    %v2753 = vsub.s32 %v2750, %v2752
    %v2754 = vrot.slane %v2738, %v2753
    %v2756 = vunpack.c.l.s4 1966171168
    %v2757 = vunpack.c.0.s8 %v2756
    %v2758 = vlaneseq
    %v2759 = vshrl.u32 %v2758, 7
    %v2760 = vsub.s32 %v2757, %v2759
    %v2761 = vrot.slane %v2739, %v2760
    %v2763 = vunpack.c.l.s4 1966171168
    %v2764 = vunpack.c.0.s8 %v2763
    %v2765 = vlaneseq
    %v2766 = vshrl.u32 %v2765, 7
    %v2767 = vsub.s32 %v2764, %v2766
    %v2768 = vrot.slane %v2740, %v2767
    %v2769 = vcombine.low %v2747, %v2754
    %v2770 = vcombine.low %v2761, %v2768
    %v2772 = vunpack.c.l.s4 1966171168
    %v2773 = vunpack.c.0.s8 %v2772
    %v2774 = vlaneseq
    %v2775 = vshrl.u32 %v2774, 7
    %v2776 = vsub.s32 %v2773, %v2775
    %v2777 = vrot.slane %v2769, %v2776
    %v2779 = vunpack.c.l.s4 1966171168
    %v2780 = vunpack.c.0.s8 %v2779
    %v2781 = vlaneseq
    %v2782 = vshrl.u32 %v2781, 7
    %v2783 = vsub.s32 %v2780, %v2782
    %v2784 = vrot.slane %v2770, %v2783
    %v2785 = vcombine.low %v2777, %v2784
    %v2786 = vcombine.low %v2141, %v2145
    %v2787 = vcombine.low %v2149, %v2153
    %v2788 = vcombine.low %v2157, %v2161
    %v2789 = vcombine.low %v2165, %v2169
    %v2791 = vunpack.c.l.s4 1966171168
    %v2792 = vunpack.c.0.s8 %v2791
    %v2793 = vlaneseq
    %v2794 = vshrl.u32 %v2793, 7
    %v2795 = vsub.s32 %v2792, %v2794
    %v2796 = vrot.slane %v2786, %v2795
    %v2798 = vunpack.c.l.s4 1966171168
    %v2799 = vunpack.c.0.s8 %v2798
    %v2800 = vlaneseq
    %v2801 = vshrl.u32 %v2800, 7
    %v2802 = vsub.s32 %v2799, %v2801
    %v2803 = vrot.slane %v2787, %v2802
    %v2805 = vunpack.c.l.s4 1966171168
    %v2806 = vunpack.c.0.s8 %v2805
    %v2807 = vlaneseq
    %v2808 = vshrl.u32 %v2807, 7
    %v2809 = vsub.s32 %v2806, %v2808
    %v2810 = vrot.slane %v2788, %v2809
    %v2812 = vunpack.c.l.s4 1966171168
    %v2813 = vunpack.c.0.s8 %v2812
    %v2814 = vlaneseq
    %v2815 = vshrl.u32 %v2814, 7
    %v2816 = vsub.s32 %v2813, %v2815
    %v2817 = vrot.slane %v2789, %v2816
    %v2818 = vcombine.low %v2796, %v2803
    %v2819 = vcombine.low %v2810, %v2817
    %v2821 = vunpack.c.l.s4 1966171168
    %v2822 = vunpack.c.0.s8 %v2821
    %v2823 = vlaneseq
    %v2824 = vshrl.u32 %v2823, 7
    %v2825 = vsub.s32 %v2822, %v2824
    %v2826 = vrot.slane %v2818, %v2825
    %v2828 = vunpack.c.l.s4 1966171168
    %v2829 = vunpack.c.0.s8 %v2828
    %v2830 = vlaneseq
    %v2831 = vshrl.u32 %v2830, 7
    %v2832 = vsub.s32 %v2829, %v2831
    %v2833 = vrot.slane %v2819, %v2832
    %v2834 = vcombine.low %v2826, %v2833
    %v2835 = vcombine.low %v2173, %v2177
    %v2836 = vcombine.low %v2181, %v2185
    %v2837 = vcombine.low %v2189, %v2193
    %v2838 = vcombine.low %v2197, %v2201
    %v2840 = vunpack.c.l.s4 1966171168
    %v2841 = vunpack.c.0.s8 %v2840
    %v2842 = vlaneseq
    %v2843 = vshrl.u32 %v2842, 7
    %v2844 = vsub.s32 %v2841, %v2843
    %v2845 = vrot.slane %v2835, %v2844
    %v2847 = vunpack.c.l.s4 1966171168
    %v2848 = vunpack.c.0.s8 %v2847
    %v2849 = vlaneseq
    %v2850 = vshrl.u32 %v2849, 7
    %v2851 = vsub.s32 %v2848, %v2850
    %v2852 = vrot.slane %v2836, %v2851
    %v2854 = vunpack.c.l.s4 1966171168
    %v2855 = vunpack.c.0.s8 %v2854
    %v2856 = vlaneseq
    %v2857 = vshrl.u32 %v2856, 7
    %v2858 = vsub.s32 %v2855, %v2857
    %v2859 = vrot.slane %v2837, %v2858
    %v2861 = vunpack.c.l.s4 1966171168
    %v2862 = vunpack.c.0.s8 %v2861
    %v2863 = vlaneseq
    %v2864 = vshrl.u32 %v2863, 7
    %v2865 = vsub.s32 %v2862, %v2864
    %v2866 = vrot.slane %v2838, %v2865
    %v2867 = vcombine.low %v2845, %v2852
    %v2868 = vcombine.low %v2859, %v2866
    %v2870 = vunpack.c.l.s4 1966171168
    %v2871 = vunpack.c.0.s8 %v2870
    %v2872 = vlaneseq
    %v2873 = vshrl.u32 %v2872, 7
    %v2874 = vsub.s32 %v2871, %v2873
    %v2875 = vrot.slane %v2867, %v2874
    %v2877 = vunpack.c.l.s4 1966171168
    %v2878 = vunpack.c.0.s8 %v2877
    %v2879 = vlaneseq
    %v2880 = vshrl.u32 %v2879, 7
    %v2881 = vsub.s32 %v2878, %v2880
    %v2882 = vrot.slane %v2868, %v2881
    %v2883 = vcombine.low %v2875, %v2882
    %v2884 = vcombine.low %v2205, %v2209
    %v2885 = vcombine.low %v2213, %v2217
    %v2886 = vcombine.low %v2221, %v2225
    %v2887 = vcombine.low %v2229, %v2233
    %v2889 = vunpack.c.l.s4 1966171168
    %v2890 = vunpack.c.0.s8 %v2889
    %v2891 = vlaneseq
    %v2892 = vshrl.u32 %v2891, 7
    %v2893 = vsub.s32 %v2890, %v2892
    %v2894 = vrot.slane %v2884, %v2893
    %v2896 = vunpack.c.l.s4 1966171168
    %v2897 = vunpack.c.0.s8 %v2896
    %v2898 = vlaneseq
    %v2899 = vshrl.u32 %v2898, 7
    %v2900 = vsub.s32 %v2897, %v2899
    %v2901 = vrot.slane %v2885, %v2900
    %v2903 = vunpack.c.l.s4 1966171168
    %v2904 = vunpack.c.0.s8 %v2903
    %v2905 = vlaneseq
    %v2906 = vshrl.u32 %v2905, 7
    %v2907 = vsub.s32 %v2904, %v2906
    %v2908 = vrot.slane %v2886, %v2907
    %v2910 = vunpack.c.l.s4 1966171168
    %v2911 = vunpack.c.0.s8 %v2910
    %v2912 = vlaneseq
    %v2913 = vshrl.u32 %v2912, 7
    %v2914 = vsub.s32 %v2911, %v2913
    %v2915 = vrot.slane %v2887, %v2914
    %v2916 = vcombine.low %v2894, %v2901
    %v2917 = vcombine.low %v2908, %v2915
    %v2919 = vunpack.c.l.s4 1966171168
    %v2920 = vunpack.c.0.s8 %v2919
    %v2921 = vlaneseq
    %v2922 = vshrl.u32 %v2921, 7
    %v2923 = vsub.s32 %v2920, %v2922
    %v2924 = vrot.slane %v2916, %v2923
    %v2926 = vunpack.c.l.s4 1966171168
    %v2927 = vunpack.c.0.s8 %v2926
    %v2928 = vlaneseq
    %v2929 = vshrl.u32 %v2928, 7
    %v2930 = vsub.s32 %v2927, %v2929
    %v2931 = vrot.slane %v2917, %v2930
    %v2932 = vcombine.low %v2924, %v2931
    %v2933 = vcombine.low %v2237, %v2241
    %v2934 = vcombine.low %v2245, %v2249
    %v2935 = vcombine.low %v2253, %v2257
    %v2936 = vcombine.low %v2261, %v2265
    %v2938 = vunpack.c.l.s4 1966171168
    %v2939 = vunpack.c.0.s8 %v2938
    %v2940 = vlaneseq
    %v2941 = vshrl.u32 %v2940, 7
    %v2942 = vsub.s32 %v2939, %v2941
    %v2943 = vrot.slane %v2933, %v2942
    %v2945 = vunpack.c.l.s4 1966171168
    %v2946 = vunpack.c.0.s8 %v2945
    %v2947 = vlaneseq
    %v2948 = vshrl.u32 %v2947, 7
    %v2949 = vsub.s32 %v2946, %v2948
    %v2950 = vrot.slane %v2934, %v2949
    %v2952 = vunpack.c.l.s4 1966171168
    %v2953 = vunpack.c.0.s8 %v2952
    %v2954 = vlaneseq
    %v2955 = vshrl.u32 %v2954, 7
    %v2956 = vsub.s32 %v2953, %v2955
    %v2957 = vrot.slane %v2935, %v2956
    %v2959 = vunpack.c.l.s4 1966171168
    %v2960 = vunpack.c.0.s8 %v2959
    %v2961 = vlaneseq
    %v2962 = vshrl.u32 %v2961, 7
    %v2963 = vsub.s32 %v2960, %v2962
    %v2964 = vrot.slane %v2936, %v2963
    %v2965 = vcombine.low %v2943, %v2950
    %v2966 = vcombine.low %v2957, %v2964
    %v2968 = vunpack.c.l.s4 1966171168
    %v2969 = vunpack.c.0.s8 %v2968
    %v2970 = vlaneseq
    %v2971 = vshrl.u32 %v2970, 7
    %v2972 = vsub.s32 %v2969, %v2971
    %v2973 = vrot.slane %v2965, %v2972
    %v2975 = vunpack.c.l.s4 1966171168
    %v2976 = vunpack.c.0.s8 %v2975
    %v2977 = vlaneseq
    %v2978 = vshrl.u32 %v2977, 7
    %v2979 = vsub.s32 %v2976, %v2978
    %v2980 = vrot.slane %v2966, %v2979
    %v2981 = vcombine.low %v2973, %v2980
    %v2982 = vcombine.low %v2269, %v2273
    %v2983 = vcombine.low %v2277, %v2281
    %v2984 = vcombine.low %v2285, %v2289
    %v2985 = vcombine.low %v2293, %v2297
    %v2987 = vunpack.c.l.s4 1966171168
    %v2988 = vunpack.c.0.s8 %v2987
    %v2989 = vlaneseq
    %v2990 = vshrl.u32 %v2989, 7
    %v2991 = vsub.s32 %v2988, %v2990
    %v2992 = vrot.slane %v2982, %v2991
    %v2994 = vunpack.c.l.s4 1966171168
    %v2995 = vunpack.c.0.s8 %v2994
    %v2996 = vlaneseq
    %v2997 = vshrl.u32 %v2996, 7
    %v2998 = vsub.s32 %v2995, %v2997
    %v2999 = vrot.slane %v2983, %v2998
    %v3001 = vunpack.c.l.s4 1966171168
    %v3002 = vunpack.c.0.s8 %v3001
    %v3003 = vlaneseq
    %v3004 = vshrl.u32 %v3003, 7
    %v3005 = vsub.s32 %v3002, %v3004
    %v3006 = vrot.slane %v2984, %v3005
    %v3008 = vunpack.c.l.s4 1966171168
    %v3009 = vunpack.c.0.s8 %v3008
    %v3010 = vlaneseq
    %v3011 = vshrl.u32 %v3010, 7
    %v3012 = vsub.s32 %v3009, %v3011
    %v3013 = vrot.slane %v2985, %v3012
    %v3014 = vcombine.low %v2992, %v2999
    %v3015 = vcombine.low %v3006, %v3013
    %v3017 = vunpack.c.l.s4 1966171168
    %v3018 = vunpack.c.0.s8 %v3017
    %v3019 = vlaneseq
    %v3020 = vshrl.u32 %v3019, 7
    %v3021 = vsub.s32 %v3018, %v3020
    %v3022 = vrot.slane %v3014, %v3021
    %v3024 = vunpack.c.l.s4 1966171168
    %v3025 = vunpack.c.0.s8 %v3024
    %v3026 = vlaneseq
    %v3027 = vshrl.u32 %v3026, 7
    %v3028 = vsub.s32 %v3025, %v3027
    %v3029 = vrot.slane %v3015, %v3028
    %v3030 = vcombine.low %v3022, %v3029
    %v3031 = vcombine.low %v2301, %v2305
    %v3032 = vcombine.low %v2309, %v2313
    %v3033 = vcombine.low %v2317, %v2321
    %v3034 = vcombine.low %v2325, %v2329
    %v3036 = vunpack.c.l.s4 1966171168
    %v3037 = vunpack.c.0.s8 %v3036
    %v3038 = vlaneseq
    %v3039 = vshrl.u32 %v3038, 7
    %v3040 = vsub.s32 %v3037, %v3039
    %v3041 = vrot.slane %v3031, %v3040
    %v3043 = vunpack.c.l.s4 1966171168
    %v3044 = vunpack.c.0.s8 %v3043
    %v3045 = vlaneseq
    %v3046 = vshrl.u32 %v3045, 7
    %v3047 = vsub.s32 %v3044, %v3046
    %v3048 = vrot.slane %v3032, %v3047
    %v3050 = vunpack.c.l.s4 1966171168
    %v3051 = vunpack.c.0.s8 %v3050
    %v3052 = vlaneseq
    %v3053 = vshrl.u32 %v3052, 7
    %v3054 = vsub.s32 %v3051, %v3053
    %v3055 = vrot.slane %v3033, %v3054
    %v3057 = vunpack.c.l.s4 1966171168
    %v3058 = vunpack.c.0.s8 %v3057
    %v3059 = vlaneseq
    %v3060 = vshrl.u32 %v3059, 7
    %v3061 = vsub.s32 %v3058, %v3060
    %v3062 = vrot.slane %v3034, %v3061
    %v3063 = vcombine.low %v3041, %v3048
    %v3064 = vcombine.low %v3055, %v3062
    %v3066 = vunpack.c.l.s4 1966171168
    %v3067 = vunpack.c.0.s8 %v3066
    %v3068 = vlaneseq
    %v3069 = vshrl.u32 %v3068, 7
    %v3070 = vsub.s32 %v3067, %v3069
    %v3071 = vrot.slane %v3063, %v3070
    %v3073 = vunpack.c.l.s4 1966171168
    %v3074 = vunpack.c.0.s8 %v3073
    %v3075 = vlaneseq
    %v3076 = vshrl.u32 %v3075, 7
    %v3077 = vsub.s32 %v3074, %v3076
    %v3078 = vrot.slane %v3064, %v3077
    %v3079 = vcombine.low %v3071, %v3078
    %v3080 = vcombine.low %v2333, %v2337
    %v3081 = vcombine.low %v2341, %v2345
    %v3082 = vcombine.low %v2349, %v2353
    %v3083 = vcombine.low %v2357, %v2361
    %v3085 = vunpack.c.l.s4 1966171168
    %v3086 = vunpack.c.0.s8 %v3085
    %v3087 = vlaneseq
    %v3088 = vshrl.u32 %v3087, 7
    %v3089 = vsub.s32 %v3086, %v3088
    %v3090 = vrot.slane %v3080, %v3089
    %v3092 = vunpack.c.l.s4 1966171168
    %v3093 = vunpack.c.0.s8 %v3092
    %v3094 = vlaneseq
    %v3095 = vshrl.u32 %v3094, 7
    %v3096 = vsub.s32 %v3093, %v3095
    %v3097 = vrot.slane %v3081, %v3096
    %v3099 = vunpack.c.l.s4 1966171168
    %v3100 = vunpack.c.0.s8 %v3099
    %v3101 = vlaneseq
    %v3102 = vshrl.u32 %v3101, 7
    %v3103 = vsub.s32 %v3100, %v3102
    %v3104 = vrot.slane %v3082, %v3103
    %v3106 = vunpack.c.l.s4 1966171168
    %v3107 = vunpack.c.0.s8 %v3106
    %v3108 = vlaneseq
    %v3109 = vshrl.u32 %v3108, 7
    %v3110 = vsub.s32 %v3107, %v3109
    %v3111 = vrot.slane %v3083, %v3110
    %v3112 = vcombine.low %v3090, %v3097
    %v3113 = vcombine.low %v3104, %v3111
    %v3115 = vunpack.c.l.s4 1966171168
    %v3116 = vunpack.c.0.s8 %v3115
    %v3117 = vlaneseq
    %v3118 = vshrl.u32 %v3117, 7
    %v3119 = vsub.s32 %v3116, %v3118
    %v3120 = vrot.slane %v3112, %v3119
    %v3122 = vunpack.c.l.s4 1966171168
    %v3123 = vunpack.c.0.s8 %v3122
    %v3124 = vlaneseq
    %v3125 = vshrl.u32 %v3124, 7
    %v3126 = vsub.s32 %v3123, %v3125
    %v3127 = vrot.slane %v3113, %v3126
    %v3128 = vcombine.low %v3120, %v3127
    %v3129 = vcombine.low %v2365, %v2369
    %v3130 = vcombine.low %v2373, %v2377
    %v3131 = vcombine.low %v2381, %v2385
    %v3132 = vcombine.low %v2389, %v2393
    %v3134 = vunpack.c.l.s4 1966171168
    %v3135 = vunpack.c.0.s8 %v3134
    %v3136 = vlaneseq
    %v3137 = vshrl.u32 %v3136, 7
    %v3138 = vsub.s32 %v3135, %v3137
    %v3139 = vrot.slane %v3129, %v3138
    %v3141 = vunpack.c.l.s4 1966171168
    %v3142 = vunpack.c.0.s8 %v3141
    %v3143 = vlaneseq
    %v3144 = vshrl.u32 %v3143, 7
    %v3145 = vsub.s32 %v3142, %v3144
    %v3146 = vrot.slane %v3130, %v3145
    %v3148 = vunpack.c.l.s4 1966171168
    %v3149 = vunpack.c.0.s8 %v3148
    %v3150 = vlaneseq
    %v3151 = vshrl.u32 %v3150, 7
    %v3152 = vsub.s32 %v3149, %v3151
    %v3153 = vrot.slane %v3131, %v3152
    %v3155 = vunpack.c.l.s4 1966171168
    %v3156 = vunpack.c.0.s8 %v3155
    %v3157 = vlaneseq
    %v3158 = vshrl.u32 %v3157, 7
    %v3159 = vsub.s32 %v3156, %v3158
    %v3160 = vrot.slane %v3132, %v3159
    %v3161 = vcombine.low %v3139, %v3146
    %v3162 = vcombine.low %v3153, %v3160
    %v3164 = vunpack.c.l.s4 1966171168
    %v3165 = vunpack.c.0.s8 %v3164
    %v3166 = vlaneseq
    %v3167 = vshrl.u32 %v3166, 7
    %v3168 = vsub.s32 %v3165, %v3167
    %v3169 = vrot.slane %v3161, %v3168
    %v3171 = vunpack.c.l.s4 1966171168
    %v3172 = vunpack.c.0.s8 %v3171
    %v3173 = vlaneseq
    %v3174 = vshrl.u32 %v3173, 7
    %v3175 = vsub.s32 %v3172, %v3174
    %v3176 = vrot.slane %v3162, %v3175
    %v3177 = vcombine.low %v3169, %v3176
    %3178 = vset.pattern.permute.xlu0 0
    %3179 = vperm.xlu0 %3178, %v2442
    %v3180 = vpop.permute.xlu0 %3179
    %3181 = vset.pattern.permute.xlu0 0
    %3182 = vperm.xlu0 %3181, %v2491
    %v3183 = vpop.permute.xlu0 %3182
    %3184 = vset.pattern.permute.xlu0 0
    %3185 = vperm.xlu0 %3184, %v2540
    %v3186 = vpop.permute.xlu0 %3185
    %3187 = vset.pattern.permute.xlu0 0
    %3188 = vperm.xlu0 %3187, %v2589
    %v3189 = vpop.permute.xlu0 %3188
    %3190 = vset.pattern.permute.xlu0 0
    %3191 = vperm.xlu0 %3190, %v2638
    %v3192 = vpop.permute.xlu0 %3191
    %3193 = vset.pattern.permute.xlu0 0
    %3194 = vperm.xlu0 %3193, %v2687
    %v3195 = vpop.permute.xlu0 %3194
    %3196 = vset.pattern.permute.xlu0 0
    %3197 = vperm.xlu0 %3196, %v2736
    %v3198 = vpop.permute.xlu0 %3197
    %3199 = vset.pattern.permute.xlu0 0
    %3200 = vperm.xlu0 %3199, %v2785
    %v3201 = vpop.permute.xlu0 %3200
    %3202 = vset.pattern.permute.xlu0 0
    %3203 = vperm.xlu0 %3202, %v2834
    %v3204 = vpop.permute.xlu0 %3203
    %3205 = vset.pattern.permute.xlu0 0
    %3206 = vperm.xlu0 %3205, %v2883
    %v3207 = vpop.permute.xlu0 %3206
    %3208 = vset.pattern.permute.xlu0 0
    %3209 = vperm.xlu0 %3208, %v2932
    %v3210 = vpop.permute.xlu0 %3209
    %3211 = vset.pattern.permute.xlu0 0
    %3212 = vperm.xlu0 %3211, %v2981
    %v3213 = vpop.permute.xlu0 %3212
    %3214 = vset.pattern.permute.xlu0 0
    %3215 = vperm.xlu0 %3214, %v3030
    %v3216 = vpop.permute.xlu0 %3215
    %3217 = vset.pattern.permute.xlu0 0
    %3218 = vperm.xlu0 %3217, %v3079
    %v3219 = vpop.permute.xlu0 %3218
    %3220 = vset.pattern.permute.xlu0 0
    %3221 = vperm.xlu0 %3220, %v3128
    %v3222 = vpop.permute.xlu0 %3221
    %3223 = vset.pattern.permute.xlu0 0
    %3224 = vperm.xlu0 %3223, %v3177
    %v3225 = vpop.permute.xlu0 %3224
    %v3226 = vlaneseq
    %v3227 = vshrl.u32 %v3226, 7
    %v3228 = vsub.s32 %v1739, %v3227
    %v3229 = vrot.slane %v3180, %v3228
    %v3230 = vlaneseq
    %v3231 = vshrl.u32 %v3230, 7
    %v3232 = vsub.s32 %v1744, %v3231
    %v3233 = vrot.slane %v3183, %v3232
    %v3234 = vsel %vm1749, %v3233, %v3229
    %v3235 = vlaneseq
    %v3236 = vshrl.u32 %v3235, 7
    %v3237 = vsub.s32 %v1751, %v3236
    %v3238 = vrot.slane %v3186, %v3237
    %v3239 = vsel %vm1756, %v3238, %v3234
    %v3240 = vlaneseq
    %v3241 = vshrl.u32 %v3240, 7
    %v3242 = vsub.s32 %v1758, %v3241
    %v3243 = vrot.slane %v3189, %v3242
    %v3244 = vsel %vm1763, %v3243, %v3239
    %v3245 = vlaneseq
    %v3246 = vshrl.u32 %v3245, 7
    %v3247 = vsub.s32 %v1765, %v3246
    %v3248 = vrot.slane %v3192, %v3247
    %v3249 = vsel %vm1770, %v3248, %v3244
    %v3250 = vlaneseq
    %v3251 = vshrl.u32 %v3250, 7
    %v3252 = vsub.s32 %v1772, %v3251
    %v3253 = vrot.slane %v3195, %v3252
    %v3254 = vsel %vm1777, %v3253, %v3249
    %v3255 = vlaneseq
    %v3256 = vshrl.u32 %v3255, 7
    %v3257 = vsub.s32 %v1779, %v3256
    %v3258 = vrot.slane %v3198, %v3257
    %v3259 = vsel %vm1784, %v3258, %v3254
    %v3260 = vlaneseq
    %v3261 = vshrl.u32 %v3260, 7
    %v3262 = vsub.s32 %v1786, %v3261
    %v3263 = vrot.slane %v3201, %v3262
    %v3264 = vsel %vm1791, %v3263, %v3259
    %v3265 = vlaneseq
    %v3266 = vshrl.u32 %v3265, 7
    %v3267 = vsub.s32 %v1793, %v3266
    %v3268 = vrot.slane %v3204, %v3267
    %v3269 = vsel %vm1798, %v3268, %v3264
    %v3270 = vlaneseq
    %v3271 = vshrl.u32 %v3270, 7
    %v3272 = vsub.s32 %v1800, %v3271
    %v3273 = vrot.slane %v3207, %v3272
    %v3274 = vsel %vm1805, %v3273, %v3269
    %v3275 = vlaneseq
    %v3276 = vshrl.u32 %v3275, 7
    %v3277 = vsub.s32 %v1807, %v3276
    %v3278 = vrot.slane %v3210, %v3277
    %v3279 = vsel %vm1812, %v3278, %v3274
    %v3280 = vlaneseq
    %v3281 = vshrl.u32 %v3280, 7
    %v3282 = vsub.s32 %v1814, %v3281
    %v3283 = vrot.slane %v3213, %v3282
    %v3284 = vsel %vm1819, %v3283, %v3279
    %v3285 = vlaneseq
    %v3286 = vshrl.u32 %v3285, 7
    %v3287 = vsub.s32 %v1821, %v3286
    %v3288 = vrot.slane %v3216, %v3287
    %v3289 = vsel %vm1826, %v3288, %v3284
    %v3290 = vlaneseq
    %v3291 = vshrl.u32 %v3290, 7
    %v3292 = vsub.s32 %v1828, %v3291
    %v3293 = vrot.slane %v3219, %v3292
    %v3294 = vsel %vm1833, %v3293, %v3289
    %v3295 = vlaneseq
    %v3296 = vshrl.u32 %v3295, 7
    %v3297 = vsub.s32 %v1835, %v3296
    %v3298 = vrot.slane %v3222, %v3297
    %v3299 = vsel %vm1840, %v3298, %v3294
    %v3300 = vlaneseq
    %v3301 = vshrl.u32 %v3300, 7
    %v3302 = vsub.s32 %v1842, %v3301
    %v3303 = vrot.slane %v3225, %v3302
    %v3304 = vsel %vm1847, %v3303, %v3299
    %v3306 = vunpack.c.l.s4 1966171168
    %v3307 = vunpack.c.0.s8 %v3306
    %v3308 = vlaneseq
    %v3309 = vshrl.u32 %v3308, 7
    %v3310 = vsub.s32 %v3307, %v3309
    %v3311 = vrot.slane %v3304, %v3310
    %v3313 = vunpack.c.l.s4 1966171168
    %v3314 = vunpack.c.0.s8 %v3313
    %v3315 = vlaneseq
    %v3316 = vshrl.u32 %v3315, 7
    %v3317 = vsub.s32 %v3314, %v3316
    %v3318 = vrot.slane %v3311, %v3317
    %v3320 = vmul.f32 %v1865, %v3318
    %3321 = vset.pattern.permute.xlu0 0
    %3322 = vperm.xlu0 %3321, %v2442
    %v3323 = vpop.permute.xlu0 %3322
    %3324 = vset.pattern.permute.xlu0 0
    %3325 = vperm.xlu0 %3324, %v2491
    %v3326 = vpop.permute.xlu0 %3325
    %3327 = vset.pattern.permute.xlu0 0
    %3328 = vperm.xlu0 %3327, %v2540
    %v3329 = vpop.permute.xlu0 %3328
    %3330 = vset.pattern.permute.xlu0 0
    %3331 = vperm.xlu0 %3330, %v2589
    %v3332 = vpop.permute.xlu0 %3331
    %3333 = vset.pattern.permute.xlu0 0
    %3334 = vperm.xlu0 %3333, %v2638
    %v3335 = vpop.permute.xlu0 %3334
    %3336 = vset.pattern.permute.xlu0 0
    %3337 = vperm.xlu0 %3336, %v2687
    %v3338 = vpop.permute.xlu0 %3337
    %3339 = vset.pattern.permute.xlu0 0
    %3340 = vperm.xlu0 %3339, %v2736
    %v3341 = vpop.permute.xlu0 %3340
    %3342 = vset.pattern.permute.xlu0 0
    %3343 = vperm.xlu0 %3342, %v2785
    %v3344 = vpop.permute.xlu0 %3343
    %3345 = vset.pattern.permute.xlu0 0
    %3346 = vperm.xlu0 %3345, %v2834
    %v3347 = vpop.permute.xlu0 %3346
    %3348 = vset.pattern.permute.xlu0 0
    %3349 = vperm.xlu0 %3348, %v2883
    %v3350 = vpop.permute.xlu0 %3349
    %3351 = vset.pattern.permute.xlu0 0
    %3352 = vperm.xlu0 %3351, %v2932
    %v3353 = vpop.permute.xlu0 %3352
    %3354 = vset.pattern.permute.xlu0 0
    %3355 = vperm.xlu0 %3354, %v2981
    %v3356 = vpop.permute.xlu0 %3355
    %3357 = vset.pattern.permute.xlu0 0
    %3358 = vperm.xlu0 %3357, %v3030
    %v3359 = vpop.permute.xlu0 %3358
    %3360 = vset.pattern.permute.xlu0 0
    %3361 = vperm.xlu0 %3360, %v3079
    %v3362 = vpop.permute.xlu0 %3361
    %3363 = vset.pattern.permute.xlu0 0
    %3364 = vperm.xlu0 %3363, %v3128
    %v3365 = vpop.permute.xlu0 %3364
    %3366 = vset.pattern.permute.xlu0 0
    %3367 = vperm.xlu0 %3366, %v3177
    %v3368 = vpop.permute.xlu0 %3367
    %v3369 = vlaneseq
    %v3370 = vshrl.u32 %v3369, 7
    %v3371 = vsub.s32 %v1739, %v3370
    %v3372 = vrot.slane %v3323, %v3371
    %v3373 = vlaneseq
    %v3374 = vshrl.u32 %v3373, 7
    %v3375 = vsub.s32 %v1744, %v3374
    %v3376 = vrot.slane %v3326, %v3375
    %v3377 = vsel %vm1749, %v3376, %v3372
    %v3378 = vlaneseq
    %v3379 = vshrl.u32 %v3378, 7
    %v3380 = vsub.s32 %v1751, %v3379
    %v3381 = vrot.slane %v3329, %v3380
    %v3382 = vsel %vm1756, %v3381, %v3377
    %v3383 = vlaneseq
    %v3384 = vshrl.u32 %v3383, 7
    %v3385 = vsub.s32 %v1758, %v3384
    %v3386 = vrot.slane %v3332, %v3385
    %v3387 = vsel %vm1763, %v3386, %v3382
    %v3388 = vlaneseq
    %v3389 = vshrl.u32 %v3388, 7
    %v3390 = vsub.s32 %v1765, %v3389
    %v3391 = vrot.slane %v3335, %v3390
    %v3392 = vsel %vm1770, %v3391, %v3387
    %v3393 = vlaneseq
    %v3394 = vshrl.u32 %v3393, 7
    %v3395 = vsub.s32 %v1772, %v3394
    %v3396 = vrot.slane %v3338, %v3395
    %v3397 = vsel %vm1777, %v3396, %v3392
    %v3398 = vlaneseq
    %v3399 = vshrl.u32 %v3398, 7
    %v3400 = vsub.s32 %v1779, %v3399
    %v3401 = vrot.slane %v3341, %v3400
    %v3402 = vsel %vm1784, %v3401, %v3397
    %v3403 = vlaneseq
    %v3404 = vshrl.u32 %v3403, 7
    %v3405 = vsub.s32 %v1786, %v3404
    %v3406 = vrot.slane %v3344, %v3405
    %v3407 = vsel %vm1791, %v3406, %v3402
    %v3408 = vlaneseq
    %v3409 = vshrl.u32 %v3408, 7
    %v3410 = vsub.s32 %v1793, %v3409
    %v3411 = vrot.slane %v3347, %v3410
    %v3412 = vsel %vm1798, %v3411, %v3407
    %v3413 = vlaneseq
    %v3414 = vshrl.u32 %v3413, 7
    %v3415 = vsub.s32 %v1800, %v3414
    %v3416 = vrot.slane %v3350, %v3415
    %v3417 = vsel %vm1805, %v3416, %v3412
    %v3418 = vlaneseq
    %v3419 = vshrl.u32 %v3418, 7
    %v3420 = vsub.s32 %v1807, %v3419
    %v3421 = vrot.slane %v3353, %v3420
    %v3422 = vsel %vm1812, %v3421, %v3417
    %v3423 = vlaneseq
    %v3424 = vshrl.u32 %v3423, 7
    %v3425 = vsub.s32 %v1814, %v3424
    %v3426 = vrot.slane %v3356, %v3425
    %v3427 = vsel %vm1819, %v3426, %v3422
    %v3428 = vlaneseq
    %v3429 = vshrl.u32 %v3428, 7
    %v3430 = vsub.s32 %v1821, %v3429
    %v3431 = vrot.slane %v3359, %v3430
    %v3432 = vsel %vm1826, %v3431, %v3427
    %v3433 = vlaneseq
    %v3434 = vshrl.u32 %v3433, 7
    %v3435 = vsub.s32 %v1828, %v3434
    %v3436 = vrot.slane %v3362, %v3435
    %v3437 = vsel %vm1833, %v3436, %v3432
    %v3438 = vlaneseq
    %v3439 = vshrl.u32 %v3438, 7
    %v3440 = vsub.s32 %v1835, %v3439
    %v3441 = vrot.slane %v3365, %v3440
    %v3442 = vsel %vm1840, %v3441, %v3437
    %v3443 = vlaneseq
    %v3444 = vshrl.u32 %v3443, 7
    %v3445 = vsub.s32 %v1842, %v3444
    %v3446 = vrot.slane %v3368, %v3445
    %v3447 = vsel %vm1847, %v3446, %v3442
    %v3449 = vunpack.c.l.s4 1966171168
    %v3450 = vunpack.c.0.s8 %v3449
    %v3451 = vlaneseq
    %v3452 = vshrl.u32 %v3451, 7
    %v3453 = vsub.s32 %v3450, %v3452
    %v3454 = vrot.slane %v3447, %v3453
    %v3456 = vunpack.c.l.s4 1966171168
    %v3457 = vunpack.c.0.s8 %v3456
    %v3458 = vlaneseq
    %v3459 = vshrl.u32 %v3458, 7
    %v3460 = vsub.s32 %v3457, %v3459
    %v3461 = vrot.slane %v3454, %v3460
    %v3463 = vmul.f32 %v3320, %v3461
    %v3464 = vadd.f32 %v1864, %v3463
    %v3465 = vmul.f32 %v3464, 0.5
    %s3466 = sadd.s32 0, 0
    %s3467 = smul.u32 %s3466, 128
    %v3468 = vlaneseq
    %v3469 = vshrl.u32 %v3468, 7
    %v3470 = vmul.u32 %v3469, 128
    %v3471 = vstv %s3467
    %v3472 = vadd.s32 %v3471, %v3470
    %v3473 = vadd.s32 %v3472, %v1739
    %v3474 = vld [vmem:[#allocation2] sm:$0x1]
    %vm3475 = vcmp.lt.s32.totalorder %v3473, 16
    %v3476 = vsel %vm3475, %v3465, 0.0
    %v3477 = vadd.f32 %v3474, %v3476
    %3478 = vst [vmem:[#allocation2] sm:$0x1] %v3477
    // Predicated region
    $region26: #{tpu_custom_call.1} parent=1 // pred_check
      %p3479 = pneg %p99
    $region27: #{tpu_custom_call.1} parent=1 // pred_check_branch
      %3481 = sbr.rel (%p3479) target = $region29
    $region28: #{tpu_custom_call.1} parent=1 // pred_region
      %v3482 = vld [vmem:[#allocation2] sm:$0x1]
      %vm3483 = vcmask 1040384
      %v3484 = vsel %vm3483, %v3482, 0.0
      %3485 = vadd.xlane.f32.xlu0 %v3484
      %v3486 = vpop.xlane.xlu0 %3485
      %v3487 = vrot.slane %v3486, 4
      %v3488 = vadd.f32 %v3486, %v3487
      %v3489 = vrot.slane %v3488, 2
      %v3490 = vadd.f32 %v3488, %v3489
      %v3491 = vrot.slane %v3490, 1
      %v3492 = vadd.f32 %v3490, %v3491
      %s3493 = vtos %v3492
      %v3494 = vstv %s3493
      %3495 = vst [vmem:[#allocation8] sm:$0xff] %v3494
    $region29: #{tpu_custom_call.1} parent=1 // pred_fallthru
      _
    // Predicated region
    $region30: #{tpu_custom_call.1} parent=1 // pred_check
      _
    $region31: #{tpu_custom_call.1} parent=1 // pred_check_branch
      %3497 = sbr.rel (0) target = $region33
    $region32: #{tpu_custom_call.1} parent=1 // pred_region
      %s3499 = ssub.s32 128, 128
      %3500 = vsyncadd [#allocation5], %s3499
      %s3502 = sshll.u32 [#allocation8], 4
      %s3503 = int_to_ptr.vmem [resolvable:$true] %s3502
      %3505 = dma.vmem_to_hbm [thread:$0]  %s3503, 128, %s3, [#allocation5]
    $region33: #{tpu_custom_call.1} parent=1 // pred_fallthru
      _
    // Predicated region
    $region34: #{tpu_custom_call.1} parent=1 // pred_check
      _
    $region35: #{tpu_custom_call.1} parent=1 // pred_check_branch
      %3507 = sbr.rel (0) target = $region37
    $region36: #{tpu_custom_call.1} parent=1 // pred_region
      %3508 = dma.done [#allocation5], 128
    $region37: #{tpu_custom_call.1} parent=1 // pred_fallthru
      _
    %3509 = vsyncpa [#allocation4], 1
    %3510 = vsyncpa [#allocation7], 1
    %3511 = vsyncpa [#allocation5], 1

</llo_original>
